<compile_context>
chip_gen: v7x
topology: tpu7x:2x2x1
jax: 0.10.0
libtpu: 0.0.40
codegen_flags: <defaults>
</compile_context>

<pallas_src>
import functools
import math

import jax
import jax.numpy as jnp
from jax import lax
from jax.experimental import pallas as pl
from jax.experimental.pallas import tpu as pltpu


# ------------------------------------------------------------------ config ---
CFG = dict(
    num_species=4,
    num_attn_blocks=2,
    lmax=1,                       # irreps_sh = 1x0e + 1x1o
    sp_embed_dim=8,               # S
    time_cutoff=10.0,
    t_embed_dim=8,                # T
    radial_cutoff=5.0,
    d_embed_dim=8,                # D
    num_heads=2,                  # H
    # per-head irreps "4x0e + 2x1o" for key / query / value
    nks=4, nkv=2,
    nqs=4, nqv=2,
    nvs=4, nvv=2,
    key_hidden=[16],
    value_hidden=[16],
    drop_out=0.0,                 # identity
)


# ------------------------------------------------------------- small utils ---
def _round_up(x, m):
    return (x + m - 1) // m * m


def _cdiv(a, b):
    return -(-a // b)


def _split_rows(m, cap=1024):
    """Sublane (row) blocking: multiples of 16 (bf16-friendly), one full block for
    small inputs (v5e/v6e single core), >=4 steps on large inputs (v7x pipeline)."""
    mpad = _round_up(m, 16)
    if mpad <= 256:
        return mpad, mpad
    blk = min(cap, max(128, _round_up(_cdiv(mpad, 4), 16)))
    return blk, _round_up(mpad, blk)


def _split_lanes(n, cap=512):
    """Lane blocking: multiples of 128, one block for small inputs, >=4 steps for big."""
    npad = _round_up(n, 128)
    if npad <= 256:
        return npad, npad
    blk = min(cap, max(128, _round_up(_cdiv(npad, 4), 128)))
    return blk, _round_up(npad, blk)


def _pad_dim(x, size, axis):
    if x.shape[axis] == size:           # common case: no pad -> no extra HBM traffic
        return x
    pad = [(0, 0)] * x.ndim
    pad[axis] = (0, size - x.shape[axis])
    return jnp.pad(x, pad)


def _block_diag(a, b):
    ra, ca = a.shape
    rb, cb = b.shape
    top = jnp.concatenate([a, jnp.zeros((ra, cb), a.dtype)], axis=1)
    bot = jnp.concatenate([jnp.zeros((rb, ca), b.dtype), b], axis=1)
    return jnp.concatenate([top, bot], axis=0)


def _fuse_mlps(mlp_a, mlp_b):
    """Fuse two same-depth MLPs that share the same input: layer0 weights are
    concatenated along the output axis, deeper layers are block-diagonal, so one
    matmul chain produces [out_a | out_b]."""
    fused = []
    for li, ((wa, ba), (wb, bb)) in enumerate(zip(mlp_a, mlp_b)):
        w = jnp.concatenate([wa, wb], axis=1) if li == 0 else _block_diag(wa, wb)
        fused.append((w, jnp.concatenate([ba, bb], axis=0)))
    return fused


def _mosaic_params(block_bytes):
    # Explicit VMEM budget (review): generous multiple of the real footprint, but never
    # above 64 MiB so the same setting is safe on v7x (64 MiB physical VMEM).
    limit = int(min(64 << 20, max(32 << 20, 4 * block_bytes)))
    return pltpu.CompilerParams(dimension_semantics=("parallel",),
                                vmem_limit_bytes=limit)


# ------------------------------------------- Pallas: fused per-edge kernel ---
def _edge_kernel(*refs, n_layers, hid0, numel_kv):
    # refs = (x, W0, b0, W1, b1, ..., o).  W* are pre-cast bf16, b* are f32.
    x_ref, o_ref = refs[0], refs[-1]
    # layer 0: block-diag(mlp_key L0 | mlp_val L0 | folded query) -> one MXU push
    h = jnp.dot(x_ref[...], refs[1][...], preferred_element_type=jnp.float32) + refs[2][...]
    q_raw = h[:, hid0:]                  # query (+ lane pad), finished after layer 0
    h = h[:, :hid0]
    for li in range(1, n_layers):
        h = h * jax.nn.sigmoid(h)        # SiLU kept in f32 (v5e: no bf16 VPU/EUP)
        h = jnp.dot(h.astype(jnp.bfloat16), refs[1 + 2 * li][...],
                    preferred_element_type=jnp.float32) + refs[2 + 2 * li][...]
    # single lane-padded bf16 output buffer: [tp-weights | query | pad] -> one dense DMA
    o_ref[:, :numel_kv] = h.astype(jnp.bfloat16)
    o_ref[:, numel_kv:] = q_raw.astype(jnp.bfloat16)


def edge_pallas(x_cat, layers, *, hid0, numel_kv, out_w):
    """x_cat:[E, (D+T)+(NS+6)] -> one bf16 buffer [E, out_w] holding the fused key/value
    TP weights (numel_kv lanes) followed by the folded query (+ zero pad)."""
    e, din = x_cat.shape
    bm, ep = _split_rows(e)

    args = [_pad_dim(x_cat.astype(jnp.bfloat16), ep, 0)]
    in_specs = [pl.BlockSpec((bm, din), lambda i: (i, 0))]
    wbytes = 0
    for w, b in layers:
        wb = w.astype(jnp.bfloat16)                       # pre-cast once (review item 1)
        bb = b.reshape(1, -1).astype(jnp.float32)
        args += [wb, bb]
        in_specs += [pl.BlockSpec(wb.shape, lambda i: (0, 0)),
                     pl.BlockSpec(bb.shape, lambda i: (0, 0))]
        wbytes += wb.size * 2 + bb.size * 4

    block_bytes = 2 * (bm * din * 2 + bm * out_w * 2) + wbytes
    out = pl.pallas_call(
        functools.partial(_edge_kernel, n_layers=len(layers), hid0=hid0,
                          numel_kv=numel_kv),
        out_shape=jax.ShapeDtypeStruct((ep, out_w), jnp.bfloat16),
        grid=(ep // bm,),
        in_specs=in_specs,
        out_specs=pl.BlockSpec((bm, out_w), lambda i: (i, 0)),
        compiler_params=_mosaic_params(block_bytes),
    )(*args)
    return out[:e]


# ------------------------------------------------ Pallas: attention kernel ---
def _attn_kernel(q_ref, k_ref, b_ref, v_ref, o_ref):
    # q,k: [Dh, L, bn] bf16   bias: [L, bn] f32   v: [Dv, L, bn] bf16   (rows on lanes)
    q = q_ref[...].astype(jnp.float32)
    k = k_ref[...].astype(jnp.float32)
    s = jnp.sum(q * k, axis=0) + b_ref[...]                    # Dh-sum = plain VPU adds
    s = s - jnp.max(s, axis=0, keepdims=True)                  # softmax over L (sublanes)
    p = jnp.exp(s)
    p = p * pl.reciprocal(jnp.sum(p, axis=0, keepdims=True), approx=False)
    v = v_ref[...].astype(jnp.float32)
    o_ref[...] = jnp.sum(p[None, :, :] * v, axis=1)            # [Dv, bn]


def attn_pallas(q, k, bias, v):
    """q,k:[Dh,L,R] bf16  bias:[L,R] f32  v:[Dv,L,R] bf16  ->  [Dv,R] f32
    (R = B*H*A sits on the 128-lane axis; L on sublanes)."""
    dh, l, r = q.shape
    dv = v.shape[0]
    bn, rp = _split_lanes(r)
    q = _pad_dim(q, rp, 2)
    k = _pad_dim(k, rp, 2)
    v = _pad_dim(v, rp, 2)
    bias = _pad_dim(bias, rp, 1)
    block_bytes = 2 * (2 * dh * l * bn * 2 + dv * l * bn * 2 + l * bn * 4 + dv * bn * 4)
    out = pl.pallas_call(
        _attn_kernel,
        out_shape=jax.ShapeDtypeStruct((dv, rp), jnp.float32),
        grid=(rp // bn,),
        in_specs=[
            pl.BlockSpec((dh, l, bn), lambda i: (0, 0, i)),
            pl.BlockSpec((dh, l, bn), lambda i: (0, 0, i)),
            pl.BlockSpec((l, bn), lambda i: (0, i)),
            pl.BlockSpec((dv, l, bn), lambda i: (0, 0, i)),
        ],
        out_specs=pl.BlockSpec((dv, bn), lambda i: (0, i)),
        compiler_params=_mosaic_params(block_bytes),
    )(q, k, bias, v)
    return out[:, :r]


# -------------------------------------------------------------- utilities ---
def soft_one_hot_linspace(x, start, end, number):
    # e3nn.math.soft_one_hot_linspace(basis='gaussian', cutoff=False)
    values = jnp.linspace(start, end, number, dtype=jnp.float32)
    step = values[1] - values[0]
    diff = (x[..., None] - values) / step
    return jnp.exp(-diff * diff) / 1.12


def compute_neighbors(coordinates, radial_cutoff, l_bucket=8):
    """Mask + top-k neighbor indices."""
    edge = coordinates[:, None, :, :] - coordinates[:, :, None, :]   # r_j - r_i
    dist = jnp.linalg.norm(edge, axis=-1)                            # [B,A,A]
    mask = (dist > radial_cutoff) | (dist == 0.0)
    # TODO(synk): data-dependent neighbor count (topk) has no static-shape Pallas
    # equivalent; computed eagerly here.  L is padded to a fixed bucket so small
    # neighbor-count changes do not recompile the Pallas kernels.
    a = coordinates.shape[1]
    l = int(jnp.max(jnp.sum(~mask, axis=-1)))
    l_pad = min(_round_up(max(l, 1), l_bucket), a)
    dist_filled = jnp.where(mask, jnp.inf, dist)
    _, idx = lax.top_k(-dist_filled, l_pad)                          # l_pad smallest dists
    return mask, idx.astype(jnp.int32), l_pad


# ------------------------------------------------------------- parameters ---
def _dense(key, shape, scale=0.2):
    return scale * jax.random.normal(key, shape, dtype=jnp.float32)


def _init_mlp(key, sizes):
    layers = []
    keys = jax.random.split(key, len(sizes) - 1)
    for k, (din, dout) in zip(keys, zip(sizes[:-1], sizes[1:])):
        kw, kb = jax.random.split(k)
        layers.append((_dense(kw, (din, dout), scale=1.0 / math.sqrt(din)),
                       _dense(kb, (dout,), scale=0.01)))
    return layers


def init_params(key, cfg):
    S, T, D, H = cfg["sp_embed_dim"], cfg["t_embed_dim"], cfg["d_embed_dim"], cfg["num_heads"]
    nks, nkv = cfg["nks"], cfg["nkv"]
    nqs, nqv = cfg["nqs"], cfg["nqv"]
    nvs, nvv = cfg["nvs"], cfg["nvv"]
    NS = S + T
    numel_k = H * (NS + 2) * (nks + nkv)   # FullyConnectedTP weight count (lmax=1 paths)
    numel_v = H * (NS + 2) * (nvs + nvv)

    keys = jax.random.split(key, 1 + cfg["num_attn_blocks"])
    params = {"sp_embed": _dense(keys[0], (cfg["num_species"], S), scale=1.0), "blocks": []}
    for bk in keys[1:]:
        k = jax.random.split(bk, 8)
        blk = dict(
            # o3.Linear(irreps_io -> irreps_query): 0e->0e dense, 1o->1o dense (no bias)
            Wq_s=_dense(k[0], (NS, H * nqs)),
            Wq_v=_dense(k[1], (2, H * nqv)),
            # o3.Linear(irreps_value -> irreps_io)
            Wout_s=_dense(k[2], (H * nvs, NS)),
            Wout_v=_dense(k[3], (H * nvv, 2)),
            # dot = FullyConnectedTensorProduct(query, key, '0e') internal weights
            dot_ss=_dense(k[4], (nqs, nks)),
            dot_vv=_dense(k[5], (nqv, nkv)),
            mlp_key=_init_mlp(k[6], [D + T] + cfg["key_hidden"] + [numel_k]),
            mlp_val=_init_mlp(k[7], [D + T] + cfg["value_hidden"] + [numel_v]),
        )
        params["blocks"].append(blk)
    return params


# ---------------------------------------------------------- E3 attn block ---
def e3_attn_block(bp, sp, coord, veloc, t, attn_bias_t, idx, cfg):
    B, A, S = sp.shape
    T = t.shape[-1]
    L = idx.shape[-1]
    H = cfg["num_heads"]
    D = cfg["d_embed_dim"]
    nks, nkv = cfg["nks"], cfg["nkv"]
    nqs, nqv = cfg["nqs"], cfg["nqv"]
    nvs, nvv = cfg["nvs"], cfg["nvv"]
    NS = S + T
    E = B * A * L

    b_ix = jnp.arange(B)[:, None, None]
    i_ix = jnp.arange(A)[None, :, None]

    # edge vectors r_j - r_i, gathered to the L nearest neighbors
    coord_edge_full = coord[:, None, :, :] - coord[:, :, None, :]
    veloc_edge_full = veloc[:, None, :, :] - veloc[:, :, None, :]
    coord_edge = coord_edge_full[b_ix, i_ix, idx]                    # [B,A,L,3]
    veloc_edge = veloc_edge_full[b_ix, i_ix, idx]

    coord_d = jnp.linalg.norm(coord_edge, axis=-1)                   # [B,A,L]
    d_embed = soft_one_hot_linspace(coord_d, 0.0, cfg["radial_cutoff"], D)
    t_ = jnp.broadcast_to(t[:, :, None, :], (B, A, L, T))
    d_t_embed = jnp.concatenate([d_embed, t_], axis=-1)              # [B,A,L,D+T]

    sp_j = sp[jnp.arange(B)[:, None, None], idx]                     # [B,A,L,S]
    t_j = t[jnp.arange(B)[:, None, None], idx]                       # [B,A,L,T]

    # spherical harmonics lmax=1, normalize=True, normalization='norm' -> sh0=1, sh1=r_hat
    sh1 = coord_edge / jnp.maximum(coord_d[..., None], 1e-12)

    # irreps_io features: scalars [sp | t], vectors [coord_edge, veloc_edge]
    s_src = jnp.concatenate([jnp.broadcast_to(sp[:, :, None, :], (B, A, L, S)), t_], axis=-1)
    v_src = jnp.stack([coord_edge / -2.0, veloc_edge / -2.0], axis=-2)   # [B,A,L,2,3]
    s_dst = jnp.concatenate([sp_j, t_j], axis=-1)
    v_dst = jnp.stack([coord_edge / 2.0, veloc_edge / 2.0], axis=-2)

    # ---- fold dot-TP weights and 1/sqrt(d_k) into the query weights (tiny, trace time)
    key_dim = nks + 3 * nkv
    scale = 1.0 / math.sqrt(key_dim)
    wq_s_eff = jnp.einsum("nhq,qk->nhk",
                          bp["Wq_s"].reshape(NS, H, nqs), bp["dot_ss"]).reshape(NS, H * nks)
    wq_v_eff = jnp.einsum("jhq,qk->jhk",
                          bp["Wq_v"].reshape(2, H, nqv), bp["dot_vv"]).reshape(2, H * nkv)
    wq_v_exp = jnp.kron(wq_v_eff, jnp.eye(3, dtype=jnp.float32))     # [6, H*nkv*3]
    wq_cat = _block_diag(wq_s_eff, wq_v_exp) * scale                 # [NS+6, H*(nks+3*nkv)]

    # ---- fused key+value edge-weight MLPs (shared input -> block-diag weights)
    fused_layers = _fuse_mlps(bp["mlp_key"], bp["mlp_val"])
    numel_k = bp["mlp_key"][-1][0].shape[1]
    numel_kv = fused_layers[-1][0].shape[1]
    hid0 = fused_layers[0][0].shape[1]
    qw = wq_cat.shape[1]

    # pad the (bias-free) query weight columns so the single output buffer is a
    # multiple of 128 lanes -> one unmasked output DMA stream
    out_w = _round_up(numel_kv + qw, 128)
    qpad = out_w - numel_kv - qw
    wq_cat_p = jnp.concatenate(
        [wq_cat, jnp.zeros((wq_cat.shape[0], qpad), jnp.float32)], axis=1) if qpad else wq_cat
    W0 = _block_diag(fused_layers[0][0], wq_cat_p)                   # [38, hid0+qw+qpad]
    b0 = jnp.concatenate([fused_layers[0][1],
                          jnp.zeros((qw + qpad,), jnp.float32)], axis=0)
    layers = [(W0, b0)] + fused_layers[1:]

    # ---- ONE Pallas pass over all edges: [wk | wv | q | pad] in a single bf16 buffer
    dte = d_t_embed.reshape(E, D + T)
    xq = jnp.concatenate([s_dst.reshape(E, NS), v_dst.reshape(E, 6)], axis=-1)
    x_cat = jnp.concatenate([dte, xq], axis=-1)                      # [E, (D+T)+(NS+6)]
    edge_out = edge_pallas(x_cat, layers, hid0=hid0, numel_kv=numel_kv, out_w=out_w)
    w_kv = edge_out[:, :numel_kv]                                    # bf16 [E, 432]
    q_all = edge_out[:, numel_kv:numel_kv + qw]                      # bf16 [E, 20]
    wk, wv = w_kv[:, :numel_k], w_kv[:, numel_k:]

    s_in = s_src.reshape(E, NS)
    v_in = v_src.reshape(E, 2, 3)
    sh1_e = sh1.reshape(E, 3)

    def weighted_tp(w_flat, n_s_out, n_v_out):
        # TODO(synk): per-edge e3nn FullyConnectedTensorProduct CG contraction kept as XLA
        # einsums (per-edge weights x geometric features needs lane-granularity relayouts
        # inside a kernel); the w_kv round trip is halved by emitting it in bf16.
        W = w_flat.reshape(E, H, NS + 2, n_s_out + n_v_out)
        Wss = W[:, :, :NS, :n_s_out]
        Wvs = W[:, :, NS:, :n_s_out]
        Wsv = W[:, :, :NS, n_s_out:]
        Wvv = W[:, :, NS:, n_s_out:]
        vdot = jnp.einsum("ejx,ex->ej", v_in, sh1_e)                      # 1o x 1o -> 0e
        out_s = (jnp.einsum("ei,ehic->ehc", s_in, Wss)                    # 0e x 0e -> 0e
                 + jnp.einsum("ej,ehjc->ehc", vdot, Wvs))
        out_v = (jnp.einsum("ei,ehic->ehc", s_in, Wsv)[..., None]         # 0e x 1o -> 1o
                 * sh1_e[:, None, None, :]
                 + jnp.einsum("ejx,ehjc->ehcx", v_in, Wvv))               # 1o x 0e -> 1o
        return out_s, out_v

    k_s, k_v = weighted_tp(wk, nks, nkv)
    v_s, v_v = weighted_tp(wv, nvs, nvv)

    def to_heads_flat(xs, xv, ns, nv):
        xs = xs.reshape(B, A, L, H, ns).transpose(0, 3, 1, 2, 4)          # [B,H,A,L,ns]
        xv = xv.reshape(B, A, L, H, nv, 3).transpose(0, 3, 1, 2, 4, 5)    # [B,H,A,L,nv,3]
        return jnp.concatenate([xs, xv.reshape(B, H, A, L, nv * 3)], axis=-1)

    k_eff = to_heads_flat(k_s, k_v, nks, nkv)                             # [B,H,A,L,Dh]
    v_flat = to_heads_flat(v_s, v_v, nvs, nvv)                            # [B,H,A,L,Dv]

    q_s_part = q_all[:, :H * nks].reshape(B, A, L, H, nks).transpose(0, 3, 1, 2, 4)
    q_v_part = q_all[:, H * nks:].reshape(B, A, L, H, nkv * 3).transpose(0, 3, 1, 2, 4)
    q_eff = jnp.concatenate([q_s_part, q_v_part], axis=-1)                # [B,H,A,L,Dh]

    # ---- attention: rows (B*H*A) on lanes, L on sublanes, bf16 operands
    Dh = nks + 3 * nkv
    Dv = nvs + 3 * nvv
    R = B * H * A

    def to_attn_layout(x):                                                # [B,H,A,L,C] -> [C,L,R]
        return x.transpose(4, 3, 0, 1, 2).reshape(x.shape[-1], L, R)

    q_t = to_attn_layout(q_eff).astype(jnp.bfloat16)
    k_t = to_attn_layout(k_eff).astype(jnp.bfloat16)
    v_t = to_attn_layout(v_flat).astype(jnp.bfloat16)
    out = attn_pallas(q_t, k_t, attn_bias_t, v_t)                         # [Dv, R] f32
    out = out.reshape(Dv, B, H, A).transpose(1, 2, 3, 0)                  # [B,H,A,Dv]

    # join heads
    out_s = out[..., :nvs].transpose(0, 2, 1, 3).reshape(B, A, H * nvs)
    out_v = out[..., nvs:].reshape(B, H, A, nvv, 3).transpose(0, 2, 1, 3, 4).reshape(B, A, H * nvv, 3)

    # ---- W_out: output widths 2..16 lanes -> left to XLA (a dedicated Pallas call is
    # pure launch overhead + fully masked stores, per perf review).
    st = (out_s.reshape(B * A, H * nvs) @ bp["Wout_s"]).reshape(B, A, NS)
    cv = (out_v.transpose(0, 1, 3, 2).reshape(B * A * 3, H * nvv) @ bp["Wout_v"]).reshape(B, A, 3, 2)

    sp_new = st[..., :S]
    t_new = st[..., S:]
    coord_new = cv[..., 0]
    veloc_new = cv[..., 1]
    # dropout p = 0.0 -> identity
    return sp_new, coord_new, veloc_new, t_new


# ---------------------------------------------------------- full EEENNDDDD ---
def model_forward(params, species_id, coordinates, velocities, time, idx, mask_full, cfg):
    species = params["sp_embed"][species_id]                              # [B,A,S]
    B, A, _ = species.shape
    T = cfg["t_embed_dim"]
    H = cfg["num_heads"]
    L = idx.shape[-1]
    t_embed = soft_one_hot_linspace(time, 0.0, cfg["time_cutoff"], T)     # [B,T]
    t_embed = jnp.broadcast_to(t_embed[:, None, :], (B, A, T))

    # additive attention bias in the attention layout [L, B*H*A] (mask/idx fixed across
    # blocks -> hoisted; -1e30 keeps fully-masked rows finite instead of -inf/NaN)
    b_ix = jnp.arange(B)[:, None, None]
    i_ix = jnp.arange(A)[None, :, None]
    mask_nb = mask_full[b_ix, i_ix, idx]                                  # [B,A,L] bool
    bias = jnp.where(mask_nb, jnp.float32(-1e30), jnp.float32(0.0))       # [B,A,L]
    bias = jnp.broadcast_to(bias[:, None, :, :], (B, H, A, L))
    attn_bias_t = bias.transpose(3, 0, 1, 2).reshape(L, B * H * A)        # [L, R]

    sp, coord, veloc, t = species, coordinates, velocities, t_embed
    for bp in params["blocks"]:
        dsp, dcoord, dveloc, dt = e3_attn_block(bp, sp, coord, veloc, t, attn_bias_t, idx, cfg)
        sp = dsp + species
        coord = dcoord + coordinates
        veloc = dveloc + velocities
        t = dt + t_embed
    # pbc / cell are None -> no wrapping
    return coord


# ----------------------------------------------------------------- driver ---
if __name__ == "__main__":
    key = jax.random.PRNGKey(0)
    kp, k1, k2, k3, k4 = jax.random.split(key, 5)
    B, A = 2, 8
    params = init_params(kp, CFG)

    species_id = jax.random.randint(k1, (B, A), 0, CFG["num_species"], dtype=jnp.int32)
    coordinates = 0.5 * jax.random.normal(k2, (B, A, 3), dtype=jnp.float32)
    velocities = 0.1 * jax.random.normal(k3, (B, A, 3), dtype=jnp.float32)
    time = jax.random.uniform(k4, (B,), minval=0.0, maxval=CFG["time_cutoff"], dtype=jnp.float32)

    mask_full, idx, l_nb = compute_neighbors(coordinates, CFG["radial_cutoff"])

    fwd = jax.jit(functools.partial(model_forward, cfg=CFG))
    coord_out = fwd(params, species_id, coordinates, velocities, time, idx, mask_full)
    coord_out = jax.block_until_ready(coord_out)
    assert coord_out.shape == (B, A, 3)
    assert bool(jnp.all(jnp.isfinite(coord_out)))
    print("KERNEL_OK")
</pallas_src>

<mosaic_0001>
module attributes {stable_mosaic.version = 11 : i64} {
  func.func @_edge_kernel(%arg0: i32, %arg1: memref<128x38xbf16, #tpu.memory_space<vmem>>, %arg2: memref<38x112xbf16, #tpu.memory_space<vmem>>, %arg3: memref<1x112xf32, #tpu.memory_space<vmem>>, %arg4: memref<32x432xbf16, #tpu.memory_space<vmem>>, %arg5: memref<1x432xf32, #tpu.memory_space<vmem>>, %arg6: memref<128x512xbf16, #tpu.memory_space<vmem>>) attributes {dimension_semantics = [#tpu.dimension_semantics<parallel>], iteration_bounds = array<i64: 1>, scalar_prefetch = 0 : i64, scratch_operands = 0 : i64, tpu.core_type = #tpu.core_type<tc>, window_params = [{transform_indices = @transform_0, window_bounds = array<i64: 128, 38>}, {pipeline_mode = #tpu.pipeline_mode<synchronous>, transform_indices = @transform_1, window_bounds = array<i64: 38, 112>}, {pipeline_mode = #tpu.pipeline_mode<synchronous>, transform_indices = @transform_2, window_bounds = array<i64: 1, 112>}, {pipeline_mode = #tpu.pipeline_mode<synchronous>, transform_indices = @transform_3, window_bounds = array<i64: 32, 432>}, {pipeline_mode = #tpu.pipeline_mode<synchronous>, transform_indices = @transform_4, window_bounds = array<i64: 1, 432>}, {transform_indices = @transform_5, window_bounds = array<i64: 128, 512>}]} {
    %c0 = arith.constant 0 : index
    %c0_0 = arith.constant 0 : index
    %0 = vector.load %arg1[%c0, %c0_0] : memref<128x38xbf16, #tpu.memory_space<vmem>>, vector<128x38xbf16>
    %c0_1 = arith.constant 0 : index
    %c0_2 = arith.constant 0 : index
    %1 = vector.load %arg2[%c0_1, %c0_2] : memref<38x112xbf16, #tpu.memory_space<vmem>>, vector<38x112xbf16>
    %cst = arith.constant dense<0.000000e+00> : vector<128x112xf32>
    %2 = tpu.matmul %0, %1, %cst {dimension_numbers = #tpu.dot_dimension_numbers<[1], [0], [0], [1], [0, 0, 1, 1], [], []>} : vector<128x38xbf16>, vector<38x112xbf16>, vector<128x112xf32> -> vector<128x112xf32>
    %c0_3 = arith.constant 0 : index
    %c0_4 = arith.constant 0 : index
    %3 = vector.load %arg3[%c0_3, %c0_4] : memref<1x112xf32, #tpu.memory_space<vmem>>, vector<1x112xf32>
    %4 = vector.broadcast %3 : vector<1x112xf32> to vector<128x112xf32>
    %5 = arith.addf %2, %4 : vector<128x112xf32>
    %6 = vector.extract_strided_slice %5 {offsets = [0, 32], sizes = [128, 80], strides = [1, 1]} : vector<128x112xf32> to vector<128x80xf32>
    %7 = vector.extract_strided_slice %5 {offsets = [0, 0], sizes = [128, 32], strides = [1, 1]} : vector<128x112xf32> to vector<128x32xf32>
    %8 = arith.negf %7 : vector<128x32xf32>
    %9 = math.exp %8 : vector<128x32xf32>
    %cst_5 = arith.constant 1.000000e+00 : f32
    %10 = vector.broadcast %cst_5 : f32 to vector<128x32xf32>
    %11 = arith.addf %10, %9 : vector<128x32xf32>
    %12 = arith.divf %10, %11 : vector<128x32xf32>
    %13 = arith.mulf %7, %12 : vector<128x32xf32>
    %14 = arith.truncf %13 : vector<128x32xf32> to vector<128x32xbf16>
    %c0_6 = arith.constant 0 : index
    %c0_7 = arith.constant 0 : index
    %15 = vector.load %arg4[%c0_6, %c0_7] : memref<32x432xbf16, #tpu.memory_space<vmem>>, vector<32x432xbf16>
    %cst_8 = arith.constant dense<0.000000e+00> : vector<128x432xf32>
    %16 = tpu.matmul %14, %15, %cst_8 {dimension_numbers = #tpu.dot_dimension_numbers<[1], [0], [0], [1], [0, 0, 1, 1], [], []>} : vector<128x32xbf16>, vector<32x432xbf16>, vector<128x432xf32> -> vector<128x432xf32>
    %c0_9 = arith.constant 0 : index
    %c0_10 = arith.constant 0 : index
    %17 = vector.load %arg5[%c0_9, %c0_10] : memref<1x432xf32, #tpu.memory_space<vmem>>, vector<1x432xf32>
    %18 = vector.broadcast %17 : vector<1x432xf32> to vector<128x432xf32>
    %19 = arith.addf %16, %18 : vector<128x432xf32>
    %20 = arith.truncf %19 : vector<128x432xf32> to vector<128x432xbf16>
    %c0_11 = arith.constant 0 : index
    %c0_12 = arith.constant 0 : index
    %21 = vector.load %arg6[%c0_11, %c0_12] : memref<128x512xbf16, #tpu.memory_space<vmem>>, vector<128x432xbf16>
    tpu.vector_store %arg6[%c0_11, %c0_12], %20 {strides = array<i32>} : memref<128x512xbf16, #tpu.memory_space<vmem>>, vector<128x432xbf16>,
    %22 = arith.truncf %6 : vector<128x80xf32> to vector<128x80xbf16>
    %c0_13 = arith.constant 0 : index
    %c432 = arith.constant 432 : index
    %23 = vector.load %arg6[%c0_13, %c432] : memref<128x512xbf16, #tpu.memory_space<vmem>>, vector<128x80xbf16>
    tpu.vector_store %arg6[%c0_13, %c432], %22 {strides = array<i32>} : memref<128x512xbf16, #tpu.memory_space<vmem>>, vector<128x80xbf16>,
    return
  }
  func.func @transform_0(%arg0: i32) -> (i32, i32) {
    %c0_i32 = arith.constant 0 : i32
    %c0_i32_0 = arith.constant 0 : i32
    return %arg0, %c0_i32 : i32, i32
  }
  func.func @transform_1(%arg0: i32) -> (i32, i32) {
    %c0_i32 = arith.constant 0 : i32
    %c0_i32_0 = arith.constant 0 : i32
    %c0_i32_1 = arith.constant 0 : i32
    return %c0_i32, %c0_i32_0 : i32, i32
  }
  func.func @transform_2(%arg0: i32) -> (i32, i32) {
    %c0_i32 = arith.constant 0 : i32
    %c0_i32_0 = arith.constant 0 : i32
    %c0_i32_1 = arith.constant 0 : i32
    return %c0_i32, %c0_i32_0 : i32, i32
  }
  func.func @transform_3(%arg0: i32) -> (i32, i32) {
    %c0_i32 = arith.constant 0 : i32
    %c0_i32_0 = arith.constant 0 : i32
    %c0_i32_1 = arith.constant 0 : i32
    return %c0_i32, %c0_i32_0 : i32, i32
  }
  func.func @transform_4(%arg0: i32) -> (i32, i32) {
    %c0_i32 = arith.constant 0 : i32
    %c0_i32_0 = arith.constant 0 : i32
    %c0_i32_1 = arith.constant 0 : i32
    return %c0_i32, %c0_i32_0 : i32, i32
  }
  func.func @transform_5(%arg0: i32) -> (i32, i32) {
    %c0_i32 = arith.constant 0 : i32
    %c0_i32_0 = arith.constant 0 : i32
    return %arg0, %c0_i32 : i32, i32
  }
}

module attributes {stable_mosaic.version = 11 : i64} {
  func.func @_attn_kernel(%arg0: i32, %arg1: memref<10x8x128xbf16, #tpu.memory_space<vmem>>, %arg2: memref<10x8x128xbf16, #tpu.memory_space<vmem>>, %arg3: memref<8x128xf32, #tpu.memory_space<vmem>>, %arg4: memref<10x8x128xbf16, #tpu.memory_space<vmem>>, %arg5: memref<10x128xf32, #tpu.memory_space<vmem>>) attributes {dimension_semantics = [#tpu.dimension_semantics<parallel>], iteration_bounds = array<i64: 1>, scalar_prefetch = 0 : i64, scratch_operands = 0 : i64, tpu.core_type = #tpu.core_type<tc>, window_params = [{transform_indices = @transform_0, window_bounds = array<i64: 10, 8, 128>}, {transform_indices = @transform_1, window_bounds = array<i64: 10, 8, 128>}, {transform_indices = @transform_2, window_bounds = array<i64: 8, 128>}, {transform_indices = @transform_3, window_bounds = array<i64: 10, 8, 128>}, {transform_indices = @transform_4, window_bounds = array<i64: 10, 128>}]} {
    %c0 = arith.constant 0 : index
    %c0_0 = arith.constant 0 : index
    %c0_1 = arith.constant 0 : index
    %0 = vector.load %arg1[%c0, %c0_0, %c0_1] : memref<10x8x128xbf16, #tpu.memory_space<vmem>>, vector<10x8x128xbf16>
    %1 = arith.extf %0 : vector<10x8x128xbf16> to vector<10x8x128xf32>
    %c0_2 = arith.constant 0 : index
    %c0_3 = arith.constant 0 : index
    %c0_4 = arith.constant 0 : index
    %2 = vector.load %arg2[%c0_2, %c0_3, %c0_4] : memref<10x8x128xbf16, #tpu.memory_space<vmem>>, vector<10x8x128xbf16>
    %3 = arith.extf %2 : vector<10x8x128xbf16> to vector<10x8x128xf32>
    %4 = arith.mulf %1, %3 : vector<10x8x128xf32>
    %cst = arith.constant dense<0.000000e+00> : vector<8x128xf32>
    %5 = vector.multi_reduction <add>, %4, %cst [0] : vector<10x8x128xf32> to vector<8x128xf32>
    %c0_5 = arith.constant 0 : index
    %c0_6 = arith.constant 0 : index
    %6 = vector.load %arg3[%c0_5, %c0_6] : memref<8x128xf32, #tpu.memory_space<vmem>>, vector<8x128xf32>
    %7 = arith.addf %5, %6 : vector<8x128xf32>
    %cst_7 = arith.constant dense<0xFF800000> : vector<128xf32>
    %8 = vector.multi_reduction <maximumf>, %7, %cst_7 [0] : vector<8x128xf32> to vector<128xf32>
    %9 = vector.shape_cast %8 : vector<128xf32> to vector<1x128xf32>
    %10 = vector.broadcast %9 : vector<1x128xf32> to vector<8x128xf32>
    %11 = arith.subf %7, %10 : vector<8x128xf32>
    %12 = math.exp %11 : vector<8x128xf32>
    %cst_8 = arith.constant dense<0.000000e+00> : vector<128xf32>
    %13 = vector.multi_reduction <add>, %12, %cst_8 [0] : vector<8x128xf32> to vector<128xf32>
    %14 = vector.shape_cast %13 : vector<128xf32> to vector<1x128xf32>
    %15 = tpu.reciprocal %14 : vector<1x128xf32> -> vector<1x128xf32>
    %16 = vector.broadcast %15 : vector<1x128xf32> to vector<8x128xf32>
    %17 = arith.mulf %12, %16 : vector<8x128xf32>
    %c0_9 = arith.constant 0 : index
    %c0_10 = arith.constant 0 : index
    %c0_11 = arith.constant 0 : index
    %18 = vector.load %arg4[%c0_9, %c0_10, %c0_11] : memref<10x8x128xbf16, #tpu.memory_space<vmem>>, vector<10x8x128xbf16>
    %19 = arith.extf %18 : vector<10x8x128xbf16> to vector<10x8x128xf32>
    %20 = vector.shape_cast %17 : vector<8x128xf32> to vector<1x8x128xf32>
    %21 = vector.broadcast %20 : vector<1x8x128xf32> to vector<10x8x128xf32>
    %22 = arith.mulf %21, %19 : vector<10x8x128xf32>
    %cst_12 = arith.constant dense<0.000000e+00> : vector<10x128xf32>
    %23 = vector.multi_reduction <add>, %22, %cst_12 [1] : vector<10x8x128xf32> to vector<10x128xf32>
    %c0_13 = arith.constant 0 : index
    %c0_14 = arith.constant 0 : index
    %24 = vector.load %arg5[%c0_13, %c0_14] : memref<10x128xf32, #tpu.memory_space<vmem>>, vector<10x128xf32>
    tpu.vector_store %arg5[%c0_13, %c0_14], %23 {strides = array<i32>} : memref<10x128xf32, #tpu.memory_space<vmem>>, vector<10x128xf32>,
    return
  }
  func.func @transform_0(%arg0: i32) -> (i32, i32, i32) {
    %c0_i32 = arith.constant 0 : i32
    %c0_i32_0 = arith.constant 0 : i32
    %c0_i32_1 = arith.constant 0 : i32
    return %c0_i32, %c0_i32_0, %arg0 : i32, i32, i32
  }
  func.func @transform_1(%arg0: i32) -> (i32, i32, i32) {
    %c0_i32 = arith.constant 0 : i32
    %c0_i32_0 = arith.constant 0 : i32
    %c0_i32_1 = arith.constant 0 : i32
    return %c0_i32, %c0_i32_0, %arg0 : i32, i32, i32
  }
  func.func @transform_2(%arg0: i32) -> (i32, i32) {
    %c0_i32 = arith.constant 0 : i32
    %c0_i32_0 = arith.constant 0 : i32
    return %c0_i32, %arg0 : i32, i32
  }
  func.func @transform_3(%arg0: i32) -> (i32, i32, i32) {
    %c0_i32 = arith.constant 0 : i32
    %c0_i32_0 = arith.constant 0 : i32
    %c0_i32_1 = arith.constant 0 : i32
    return %c0_i32, %c0_i32_0, %arg0 : i32, i32, i32
  }
  func.func @transform_4(%arg0: i32) -> (i32, i32) {
    %c0_i32 = arith.constant 0 : i32
    %c0_i32_0 = arith.constant 0 : i32
    return %c0_i32, %arg0 : i32, i32
  }
}

</mosaic_0001>

<llo_original>
// kernel: mul.19
$region0: #{mul.19}
  %s0 = inlined_call_operand.vmem [shape: f32[2,2,2], index: 0, kind: input, shape index: {}]
  %s1 = inlined_call_operand.vmem [shape: f32[2,4], index: 1, kind: output, shape index: {}]
  $region1: #{mul.19} parent=0
    #allocation0 [shape = 'u8[4096]{0}', space=vmem, size = 0x1000, scoped, tag = 'scoped mem for output reshape']
    #allocation1 [shape = 'u8[8192]{0}', space=vmem, size = 0x2000, scoped, tag = 'scoped mem for input reshape']
    %s3 = sshllo.u32 0, 2
    %s4 = scalar_lea.vmem %s0, 2
    %v5 = vld [vmem:[%s4] sm:%s3]
    %s6 = scalar_lea.vmem [#allocation1], 8
    %7 = vst [vmem:[%s6] sm:%s3] %v5
    %v8 = vld [vmem:[%s0] sm:%s3]
    %9 = vst [vmem:[#allocation1] sm:%s3] %v8
    %s10 = smov 3
    %v11 = vld [vmem:[#allocation1] ss:$8 sm:%s10]
    %vm12 = vcmask 15360
    %13 = vst.msk [vmem:[#allocation0] sm:$0x3] %vm12, %v11
    %s14 = scalar_lea.vmem [#allocation1], 1
    %s15 = smov 3
    %v16 = vld [vmem:[%s14] ss:$8 sm:%s15]
    %17 = vrot.lane.b32.xlu0 %v16, 2
    %v18 = vpop.permute.xlu0 %17
    %vm19 = vcmask 31760
    %20 = vst.msk [vmem:[#allocation0] sm:$0x3] %vm19, %v18
    %s22 = sshllo.u32 0, 2
    %v24 = vld [vmem:[#allocation0] sm:%s22]
    %s25 = sshllo.u32 0, 2
    %26 = vst [vmem:[%s1] sm:%s25] %v24

// kernel: model_forward.4
$region0: #{model_forward.4}
  #allocation0 [shape = 'u32[]', space=smem, size = 0x4, offset = 0x4, fixed_abs, tag = 'smem constant byte address 0x4 - core index']
  #allocation1 [shape = 'u32[144,128]{1,0:T(1,128)}', space=vmem, size = 0x12000, scoped, tag = 'internal scratch']
  %s0 = inlined_call_operand.vmem [shape: bf16[128,38], index: 0, kind: input, shape index: {}]
  %s1 = inlined_call_operand.vmem [shape: bf16[38,112], index: 1, kind: input, shape index: {}]
  %s2 = inlined_call_operand.vmem [shape: f32[1,112], index: 2, kind: input, shape index: {}]
  %s3 = inlined_call_operand.vmem [shape: bf16[32,432], index: 3, kind: input, shape index: {}]
  %s4 = inlined_call_operand.vmem [shape: f32[1,432], index: 4, kind: input, shape index: {}]
  %s5 = inlined_call_operand.vmem [shape: bf16[128,512], index: 5, kind: output, shape index: {}]
  %s6 = sld [smem:[#allocation0]]
  $region30: #{model_forward.4} parent=0
    _
  %s8 = ssub.s32 1, %s6
  %s9 = scalar_select 0, %s8, %s6
  // Predicated region
  $region2: #{model_forward.4} parent=0 // pred_check
    _
  $region3: #{model_forward.4} parent=0 // pred_check_branch
    %11 = sbr.rel (0) target = $region5
  $region4: #{model_forward.4} parent=0 // pred_region
    _
  $region5: #{model_forward.4} parent=0 // pred_fallthru
    _
  // Predicated region
  $region6: #{model_forward.4} parent=0 // pred_check
    _
  $region7: #{model_forward.4} parent=0 // pred_check_branch
    %13 = sbr.rel (0) target = $region9
  $region8: #{model_forward.4} parent=0 // pred_region
    _
  $region9: #{model_forward.4} parent=0 // pred_fallthru
    _
  // Predicated region
  $region10: #{model_forward.4} parent=0 // pred_check
    _
  $region11: #{model_forward.4} parent=0 // pred_check_branch
    %15 = sbr.rel (0) target = $region13
  $region12: #{model_forward.4} parent=0 // pred_region
    _
  $region13: #{model_forward.4} parent=0 // pred_fallthru
    _
  // Predicated region
  $region14: #{model_forward.4} parent=0 // pred_check
    _
  $region15: #{model_forward.4} parent=0 // pred_check_branch
    %17 = sbr.rel (0) target = $region17
  $region16: #{model_forward.4} parent=0 // pred_region
    _
  $region17: #{model_forward.4} parent=0 // pred_fallthru
    _
  // Predicated region
  $region18: #{model_forward.4} parent=0 // pred_check
    _
  $region19: #{model_forward.4} parent=0 // pred_check_branch
    %19 = sbr.rel (0) target = $region21
  $region20: #{model_forward.4} parent=0 // pred_region
    _
  $region21: #{model_forward.4} parent=0 // pred_fallthru
    _
  %v21 = vld [vmem:[%s0] sm:$0xf]
  %v22 = vld [vmem:[%s0 + $0x4] sm:$0xf]
  %v23 = vld [vmem:[%s0 + $0x8] sm:$0xf]
  %v24 = vld [vmem:[%s0 + $0xc] sm:$0xf]
  %v25 = vld [vmem:[%s0 + $0x10] sm:$0xf]
  %v26 = vld [vmem:[%s0 + $0x14] sm:$0xf]
  %v27 = vld [vmem:[%s0 + $0x18] sm:$0xf]
  %v28 = vld [vmem:[%s0 + $0x1c] sm:$0xf]
  %v29 = vld [vmem:[%s0 + $0x20] sm:$0xf]
  %v30 = vld [vmem:[%s0 + $0x24] sm:$0xf]
  %v31 = vld [vmem:[%s0 + $0x28] sm:$0xf]
  %v32 = vld [vmem:[%s0 + $0x2c] sm:$0xf]
  %v33 = vld [vmem:[%s0 + $0x30] sm:$0xf]
  %v34 = vld [vmem:[%s0 + $0x34] sm:$0xf]
  %v35 = vld [vmem:[%s0 + $0x38] sm:$0xf]
  %v36 = vld [vmem:[%s0 + $0x3c] sm:$0xf]
  %v37 = vld [vmem:[%s1] sm:$0xf]
  %v38 = vld [vmem:[%s1 + $0x4] sm:$0xf]
  %v39 = vld [vmem:[%s1 + $0x8] sm:$0xf]
  %v40 = vld [vmem:[%s1 + $0xc] sm:$0xf]
  %v41 = vld [vmem:[%s1 + $0x10] sm:$0x7]
  %v42 = vld [vmem:[%s2] sm:$0x1]
  %v44 = vlaneseq
  %v45 = vshrl.u32 %v44, 7
  %v46 = vsub.s32 0, %v45
  %v47 = vrot.slane %v42, %v46
  %v65 = vunpack.c.l.b16 %v21
  %v66 = vunpack.c.l.b16 %v22
  %v67 = vunpack.c.l.b16 %v23
  %v68 = vunpack.c.l.b16 %v24
  %v69 = vunpack.c.l.b16 %v25
  %v70 = vunpack.c.l.b16 %v26
  %v71 = vunpack.c.l.b16 %v27
  %v72 = vunpack.c.l.b16 %v28
  %v73 = vunpack.c.l.b16 %v29
  %v74 = vunpack.c.l.b16 %v30
  %v75 = vunpack.c.l.b16 %v31
  %v76 = vunpack.c.l.b16 %v32
  %v77 = vunpack.c.l.b16 %v33
  %v78 = vunpack.c.l.b16 %v34
  %v79 = vunpack.c.l.b16 %v35
  %v80 = vunpack.c.l.b16 %v36
  %v81 = vpack.c.b16 %v66, %v65
  %v82 = vpack.c.b16 %v68, %v67
  %v83 = vpack.c.b16 %v70, %v69
  %v84 = vpack.c.b16 %v72, %v71
  %v85 = vpack.c.b16 %v74, %v73
  %v86 = vpack.c.b16 %v76, %v75
  %v87 = vpack.c.b16 %v78, %v77
  %v88 = vpack.c.b16 %v80, %v79
  %v94 = vunpack.c.l.b16 %v37
  %v95 = vunpack.c.l.b16 %v38
  %v96 = vunpack.c.l.b16 %v39
  %v97 = vunpack.c.l.b16 %v40
  %v98 = vunpack.c.l.b16 %v41
  %v99 = vpack.c.b16 %v95, %v94
  %v100 = vpack.c.b16 %v97, %v96
  %v101 = vpack.c.b16 %v98, %v98
  %vm104 = vcmask 310272
  %v106 = vsel %vm104, %v81, 0
  %v109 = vsel %vm104, %v82, 0
  %v112 = vsel %vm104, %v83, 0
  %v115 = vsel %vm104, %v84, 0
  %v118 = vsel %vm104, %v85, 0
  %v121 = vsel %vm104, %v86, 0
  %v124 = vsel %vm104, %v87, 0
  %v127 = vsel %vm104, %v88, 0
  %vm129 = vcmask 1042432
  %v131 = vsel %vm129, %v101, 0
  %133 = vmatprep.subr.bf16.mxu0 0
  %134 = vmatpush1.bf16.msra.mxu0 %v99
  %135 = vmatprep.subr.bf16.mxu0 0
  %136 = vmatpush1.bf16.msra.mxu0 %v100
  %137 = vmatprep.subr.bf16.mxu0 0
  %138 = vmatpush1.bf16.msra.mxu0 %v131
  %139 = vmatprep.subr.bf16.mxu0 0
  %140 = vmatpush1.bf16.msra.mxu0 0
  %141 = vmatprep.subr.bf16.mxu0 0
  %142 = vmatpush1.bf16.msra.mxu0 0
  %143 = vmatprep.subr.bf16.mxu0 0
  %144 = vmatpush1.bf16.msra.mxu0 0
  %145 = vmatprep.subr.bf16.mxu0 0
  %146 = vmatpush1.bf16.msra.mxu0 0
  %147 = vmatprep.subr.bf16.mxu0 0
  %148 = vmatpush1.bf16.msra.mxu0 0
  %149 = vmatprep.subr.bf16.mxu0 0
  %150 = vmatpush1.bf16.msra.mxu0 0
  %151 = vmatprep.subr.bf16.mxu0 0
  %152 = vmatpush1.bf16.msra.mxu0 0
  %153 = vmatprep.subr.bf16.mxu0 0
  %154 = vmatpush1.bf16.msra.mxu0 0
  %155 = vmatprep.subr.bf16.mxu0 0
  %156 = vmatpush1.bf16.msra.mxu0 0
  %157 = vmatprep.subr.bf16.mxu0 0
  %158 = vmatpush1.bf16.msra.mxu0 0
  %159 = vmatprep.subr.bf16.mxu0 0
  %160 = vmatpush1.bf16.msra.mxu0 0
  %161 = vmatprep.subr.bf16.mxu0 0
  %162 = vmatpush1.bf16.msra.mxu0 0
  %163 = vmatprep.subr.bf16.mxu0 0
  %164 = vmatpush1.bf16.msra.mxu0 0
  %165 = vmatprep.mubr.bf16.mxu0 0
  %166 = vmatmul.mubr.bf16.gmra.mrb[0].mxu0 %v106
  %v167 = vpop.f32.mrb[0].mxu0
  %v168 = vadd.f32 %v47, %v167
  %v169 = vpop.f32.mrb[0].mxu0
  %v170 = vpop.f32.mrb[0].mxu0
  %v171 = vadd.f32 %v47, %v170
  %v172 = vpop.f32.mrb[0].mxu0
  %173 = vmatprep.mubr.bf16.mxu0 0
  %174 = vmatmul.mubr.bf16.gmra.mrb[0].mxu0 %v109
  %v175 = vpop.f32.mrb[0].mxu0
  %v176 = vadd.f32 %v47, %v175
  %v177 = vpop.f32.mrb[0].mxu0
  %v178 = vpop.f32.mrb[0].mxu0
  %v179 = vadd.f32 %v47, %v178
  %v180 = vpop.f32.mrb[0].mxu0
  %181 = vmatprep.mubr.bf16.mxu0 0
  %182 = vmatmul.mubr.bf16.gmra.mrb[0].mxu0 %v112
  %v183 = vpop.f32.mrb[0].mxu0
  %v184 = vadd.f32 %v47, %v183
  %v185 = vpop.f32.mrb[0].mxu0
  %v186 = vpop.f32.mrb[0].mxu0
  %v187 = vadd.f32 %v47, %v186
  %v188 = vpop.f32.mrb[0].mxu0
  %189 = vmatprep.mubr.bf16.mxu0 0
  %190 = vmatmul.mubr.bf16.gmra.mrb[0].mxu0 %v115
  %v191 = vpop.f32.mrb[0].mxu0
  %v192 = vadd.f32 %v47, %v191
  %v193 = vpop.f32.mrb[0].mxu0
  %v194 = vpop.f32.mrb[0].mxu0
  %v195 = vadd.f32 %v47, %v194
  %v196 = vpop.f32.mrb[0].mxu0
  %197 = vmatprep.mubr.bf16.mxu0 0
  %198 = vmatmul.mubr.bf16.gmra.mrb[0].mxu0 %v118
  %v199 = vpop.f32.mrb[0].mxu0
  %v200 = vadd.f32 %v47, %v199
  %v201 = vpop.f32.mrb[0].mxu0
  %v202 = vpop.f32.mrb[0].mxu0
  %v203 = vadd.f32 %v47, %v202
  %v204 = vpop.f32.mrb[0].mxu0
  %205 = vmatprep.mubr.bf16.mxu0 0
  %206 = vmatmul.mubr.bf16.gmra.mrb[0].mxu0 %v121
  %v207 = vpop.f32.mrb[0].mxu0
  %v208 = vadd.f32 %v47, %v207
  %v209 = vpop.f32.mrb[0].mxu0
  %v210 = vpop.f32.mrb[0].mxu0
  %v211 = vadd.f32 %v47, %v210
  %v212 = vpop.f32.mrb[0].mxu0
  %213 = vmatprep.mubr.bf16.mxu0 0
  %214 = vmatmul.mubr.bf16.gmra.mrb[0].mxu0 %v124
  %v215 = vpop.f32.mrb[0].mxu0
  %v216 = vadd.f32 %v47, %v215
  %v217 = vpop.f32.mrb[0].mxu0
  %v218 = vpop.f32.mrb[0].mxu0
  %v219 = vadd.f32 %v47, %v218
  %v220 = vpop.f32.mrb[0].mxu0
  %221 = vmatprep.mubr.bf16.mxu0 0
  %222 = vmatmul.mubr.bf16.gmra.mrb[0].mxu0 %v127
  %v223 = vpop.f32.mrb[0].mxu0
  %v224 = vadd.f32 %v47, %v223
  %v225 = vpop.f32.mrb[0].mxu0
  %v226 = vpop.f32.mrb[0].mxu0
  %v227 = vadd.f32 %v47, %v226
  %v228 = vpop.f32.mrb[0].mxu0
  %229 = vdwg.mxu0
  %v230 = vxor.u32 %v168, 2147483648
  %v231 = vxor.u32 %v171, 2147483648
  %v232 = vxor.u32 %v176, 2147483648
  %v233 = vxor.u32 %v179, 2147483648
  %v234 = vxor.u32 %v184, 2147483648
  %v235 = vxor.u32 %v187, 2147483648
  %v236 = vxor.u32 %v192, 2147483648
  %v237 = vxor.u32 %v195, 2147483648
  %v238 = vxor.u32 %v200, 2147483648
  %v239 = vxor.u32 %v203, 2147483648
  %v240 = vxor.u32 %v208, 2147483648
  %v241 = vxor.u32 %v211, 2147483648
  %v242 = vxor.u32 %v216, 2147483648
  %v243 = vxor.u32 %v219, 2147483648
  %v244 = vxor.u32 %v224, 2147483648
  %v245 = vxor.u32 %v227, 2147483648
  %v246 = vmul.f32 %v230, 1.442695
  %v247 = vpow.pop %v246
  %v248 = vmul.f32 %v231, 1.442695
  %v249 = vpow.pop %v248
  %v250 = vmul.f32 %v232, 1.442695
  %v251 = vpow.pop %v250
  %v252 = vmul.f32 %v233, 1.442695
  %v253 = vpow.pop %v252
  %v254 = vmul.f32 %v234, 1.442695
  %v255 = vpow.pop %v254
  %v256 = vmul.f32 %v235, 1.442695
  %v257 = vpow.pop %v256
  %v258 = vmul.f32 %v236, 1.442695
  %v259 = vpow.pop %v258
  %v260 = vmul.f32 %v237, 1.442695
  %v261 = vpow.pop %v260
  %v262 = vmul.f32 %v238, 1.442695
  %v263 = vpow.pop %v262
  %v264 = vmul.f32 %v239, 1.442695
  %v265 = vpow.pop %v264
  %v266 = vmul.f32 %v240, 1.442695
  %v267 = vpow.pop %v266
  %v268 = vmul.f32 %v241, 1.442695
  %v269 = vpow.pop %v268
  %v270 = vmul.f32 %v242, 1.442695
  %v271 = vpow.pop %v270
  %v272 = vmul.f32 %v243, 1.442695
  %v273 = vpow.pop %v272
  %v274 = vmul.f32 %v244, 1.442695
  %v275 = vpow.pop %v274
  %v276 = vmul.f32 %v245, 1.442695
  %v277 = vpow.pop %v276
  %v278 = vadd.f32 %v247, 1.0
  %v279 = vadd.f32 %v249, 1.0
  %v280 = vadd.f32 %v251, 1.0
  %v281 = vadd.f32 %v253, 1.0
  %v282 = vadd.f32 %v255, 1.0
  %v283 = vadd.f32 %v257, 1.0
  %v284 = vadd.f32 %v259, 1.0
  %v285 = vadd.f32 %v261, 1.0
  %v286 = vadd.f32 %v263, 1.0
  %v287 = vadd.f32 %v265, 1.0
  %v288 = vadd.f32 %v267, 1.0
  %v289 = vadd.f32 %v269, 1.0
  %v290 = vadd.f32 %v271, 1.0
  %v291 = vadd.f32 %v273, 1.0
  %v292 = vadd.f32 %v275, 1.0
  %v293 = vadd.f32 %v277, 1.0
  %v294 = vrcp.pop %v278
  %v295 = vmul.f32 1.0, %v294
  %v296 = vrcp.pop %v279
  %v297 = vmul.f32 1.0, %v296
  %v298 = vrcp.pop %v280
  %v299 = vmul.f32 1.0, %v298
  %v300 = vrcp.pop %v281
  %v301 = vmul.f32 1.0, %v300
  %v302 = vrcp.pop %v282
  %v303 = vmul.f32 1.0, %v302
  %v304 = vrcp.pop %v283
  %v305 = vmul.f32 1.0, %v304
  %v306 = vrcp.pop %v284
  %v307 = vmul.f32 1.0, %v306
  %v308 = vrcp.pop %v285
  %v309 = vmul.f32 1.0, %v308
  %v310 = vrcp.pop %v286
  %v311 = vmul.f32 1.0, %v310
  %v312 = vrcp.pop %v287
  %v313 = vmul.f32 1.0, %v312
  %v314 = vrcp.pop %v288
  %v315 = vmul.f32 1.0, %v314
  %v316 = vrcp.pop %v289
  %v317 = vmul.f32 1.0, %v316
  %v318 = vrcp.pop %v290
  %v319 = vmul.f32 1.0, %v318
  %v320 = vrcp.pop %v291
  %v321 = vmul.f32 1.0, %v320
  %v322 = vrcp.pop %v292
  %v323 = vmul.f32 1.0, %v322
  %v324 = vrcp.pop %v293
  %v325 = vmul.f32 1.0, %v324
  %v326 = vmul.f32 %v168, %v295
  %v327 = vmul.f32 %v171, %v297
  %v328 = vmul.f32 %v176, %v299
  %v329 = vmul.f32 %v179, %v301
  %v330 = vmul.f32 %v184, %v303
  %v331 = vmul.f32 %v187, %v305
  %v332 = vmul.f32 %v192, %v307
  %v333 = vmul.f32 %v195, %v309
  %v334 = vmul.f32 %v200, %v311
  %v335 = vmul.f32 %v203, %v313
  %v336 = vmul.f32 %v208, %v315
  %v337 = vmul.f32 %v211, %v317
  %v338 = vmul.f32 %v216, %v319
  %v339 = vmul.f32 %v219, %v321
  %v340 = vmul.f32 %v224, %v323
  %v341 = vmul.f32 %v227, %v325
  %v342 = vpack.c.bf16 %v327, %v326
  %v343 = vpack.c.bf16 %v329, %v328
  %v344 = vpack.c.bf16 %v331, %v330
  %v345 = vpack.c.bf16 %v333, %v332
  %v346 = vpack.c.bf16 %v335, %v334
  %v347 = vpack.c.bf16 %v337, %v336
  %v348 = vpack.c.bf16 %v339, %v338
  %v349 = vpack.c.bf16 %v341, %v340
  %v350 = vld [vmem:[%s3] sm:$0xff]
  %v351 = vld [vmem:[%s3 + $0x8] sm:$0xff]
  %v352 = vld [vmem:[%s3 + $0x10] sm:$0xff]
  %v353 = vld [vmem:[%s3 + $0x18] sm:$0xff]
  %v354 = vld [vmem:[%s3 + $0x20] sm:$0xff]
  %v355 = vld [vmem:[%s3 + $0x28] sm:$0xff]
  %v356 = vld [vmem:[%s3 + $0x30] sm:$0xff]
  %v357 = vld [vmem:[%s3 + $0x38] sm:$0xff]
  %v358 = vld [vmem:[%s4] sm:$0xf]
  %v360 = vlaneseq
  %v361 = vshrl.u32 %v360, 7
  %v362 = vsub.s32 0, %v361
  %v363 = vrot.slane %v358, %v362
  %v364 = vlaneseq
  %v365 = vshrl.u32 %v364, 7
  %v366 = vsub.s32 1, %v365
  %v367 = vrot.slane %v358, %v366
  %v368 = vlaneseq
  %v369 = vshrl.u32 %v368, 7
  %v370 = vsub.s32 2, %v369
  %v371 = vrot.slane %v358, %v370
  %v372 = vlaneseq
  %v373 = vshrl.u32 %v372, 7
  %v374 = vsub.s32 3, %v373
  %v375 = vrot.slane %v358, %v374
  %v388 = vunpack.c.l.b16 %v350
  %v389 = vunpack.c.h.b16 %v350
  %v390 = vunpack.c.l.b16 %v351
  %v391 = vunpack.c.h.b16 %v351
  %v392 = vunpack.c.l.b16 %v352
  %v393 = vunpack.c.h.b16 %v352
  %v394 = vunpack.c.l.b16 %v353
  %v395 = vunpack.c.h.b16 %v353
  %v396 = vunpack.c.l.b16 %v354
  %v397 = vunpack.c.h.b16 %v354
  %v398 = vunpack.c.l.b16 %v355
  %v399 = vunpack.c.h.b16 %v355
  %v400 = vunpack.c.l.b16 %v356
  %v401 = vunpack.c.h.b16 %v356
  %v402 = vunpack.c.l.b16 %v357
  %v403 = vunpack.c.h.b16 %v357
  %v404 = vpack.c.b16 %v392, %v388
  %v405 = vpack.c.b16 %v393, %v389
  %v406 = vpack.c.b16 %v394, %v390
  %v407 = vpack.c.b16 %v395, %v391
  %v408 = vpack.c.b16 %v400, %v396
  %v409 = vpack.c.b16 %v401, %v397
  %v410 = vpack.c.b16 %v402, %v398
  %v411 = vpack.c.b16 %v403, %v399
  %vm420 = vcmask 261120
  %v422 = vsel %vm420, %v342, 0
  %v425 = vsel %vm420, %v343, 0
  %v428 = vsel %vm420, %v344, 0
  %v431 = vsel %vm420, %v345, 0
  %v434 = vsel %vm420, %v346, 0
  %v437 = vsel %vm420, %v347, 0
  %v440 = vsel %vm420, %v348, 0
  %v443 = vsel %vm420, %v349, 0
  %445 = vmatprep.subr.bf16.mxu0 %v405
  %446 = vmatpush1.bf16.msra.mxu0 %v404
  %447 = vmatprep.subr.bf16.mxu0 %v409
  %448 = vmatpush1.bf16.msra.mxu0 %v408
  %449 = vmatprep.subr.bf16.mxu0 0
  %450 = vmatpush1.bf16.msra.mxu0 0
  %451 = vmatprep.subr.bf16.mxu0 0
  %452 = vmatpush1.bf16.msra.mxu0 0
  %453 = vmatprep.subr.bf16.mxu0 0
  %454 = vmatpush1.bf16.msra.mxu0 0
  %455 = vmatprep.subr.bf16.mxu0 0
  %456 = vmatpush1.bf16.msra.mxu0 0
  %457 = vmatprep.subr.bf16.mxu0 0
  %458 = vmatpush1.bf16.msra.mxu0 0
  %459 = vmatprep.subr.bf16.mxu0 0
  %460 = vmatpush1.bf16.msra.mxu0 0
  %461 = vmatprep.subr.bf16.mxu0 0
  %462 = vmatpush1.bf16.msra.mxu0 0
  %463 = vmatprep.subr.bf16.mxu0 0
  %464 = vmatpush1.bf16.msra.mxu0 0
  %465 = vmatprep.subr.bf16.mxu0 0
  %466 = vmatpush1.bf16.msra.mxu0 0
  %467 = vmatprep.subr.bf16.mxu0 0
  %468 = vmatpush1.bf16.msra.mxu0 0
  %469 = vmatprep.subr.bf16.mxu0 0
  %470 = vmatpush1.bf16.msra.mxu0 0
  %471 = vmatprep.subr.bf16.mxu0 0
  %472 = vmatpush1.bf16.msra.mxu0 0
  %473 = vmatprep.subr.bf16.mxu0 0
  %474 = vmatpush1.bf16.msra.mxu0 0
  %475 = vmatprep.subr.bf16.mxu0 0
  %476 = vmatpush1.bf16.msra.mxu0 0
  %477 = vmatprep.mubr.bf16.mxu0 0
  %478 = vmatmul.mubr.bf16.gmra.mrb[0].mxu0 %v422
  %v479 = vpop.f32.mrb[0].mxu0
  %v480 = vadd.f32 %v363, %v479
  %v481 = vpop.f32.mrb[0].mxu0
  %v482 = vadd.f32 %v367, %v481
  %v483 = vpop.f32.mrb[0].mxu0
  %v484 = vadd.f32 %v363, %v483
  %v485 = vpop.f32.mrb[0].mxu0
  %v486 = vadd.f32 %v367, %v485
  %487 = vmatprep.mubr.bf16.mxu0 0
  %488 = vmatmul.mubr.bf16.gmra.mrb[0].mxu0 %v425
  %v489 = vpop.f32.mrb[0].mxu0
  %v490 = vadd.f32 %v363, %v489
  %v491 = vpop.f32.mrb[0].mxu0
  %v492 = vadd.f32 %v367, %v491
  %v493 = vpop.f32.mrb[0].mxu0
  %v494 = vadd.f32 %v363, %v493
  %v495 = vpop.f32.mrb[0].mxu0
  %v496 = vadd.f32 %v367, %v495
  %497 = vmatprep.mubr.bf16.mxu0 0
  %498 = vmatmul.mubr.bf16.gmra.mrb[0].mxu0 %v428
  %v499 = vpop.f32.mrb[0].mxu0
  %v500 = vadd.f32 %v363, %v499
  %v501 = vpop.f32.mrb[0].mxu0
  %v502 = vadd.f32 %v367, %v501
  %v503 = vpop.f32.mrb[0].mxu0
  %v504 = vadd.f32 %v363, %v503
  %v505 = vpop.f32.mrb[0].mxu0
  %v506 = vadd.f32 %v367, %v505
  %507 = vmatprep.mubr.bf16.mxu0 0
  %508 = vmatmul.mubr.bf16.gmra.mrb[0].mxu0 %v431
  %v509 = vpop.f32.mrb[0].mxu0
  %v510 = vadd.f32 %v363, %v509
  %v511 = vpop.f32.mrb[0].mxu0
  %v512 = vadd.f32 %v367, %v511
  %v513 = vpop.f32.mrb[0].mxu0
  %v514 = vadd.f32 %v363, %v513
  %v515 = vpop.f32.mrb[0].mxu0
  %v516 = vadd.f32 %v367, %v515
  %517 = vmatprep.mubr.bf16.mxu0 0
  %518 = vmatmul.mubr.bf16.gmra.mrb[0].mxu0 %v434
  %v519 = vpop.f32.mrb[0].mxu0
  %v520 = vadd.f32 %v363, %v519
  %v521 = vpop.f32.mrb[0].mxu0
  %v522 = vadd.f32 %v367, %v521
  %v523 = vpop.f32.mrb[0].mxu0
  %v524 = vadd.f32 %v363, %v523
  %v525 = vpop.f32.mrb[0].mxu0
  %v526 = vadd.f32 %v367, %v525
  %527 = vmatprep.mubr.bf16.mxu0 0
  %528 = vmatmul.mubr.bf16.gmra.mrb[0].mxu0 %v437
  %v529 = vpop.f32.mrb[0].mxu0
  %v530 = vadd.f32 %v363, %v529
  %v531 = vpop.f32.mrb[0].mxu0
  %v532 = vadd.f32 %v367, %v531
  %v533 = vpop.f32.mrb[0].mxu0
  %v534 = vadd.f32 %v363, %v533
  %v535 = vpop.f32.mrb[0].mxu0
  %v536 = vadd.f32 %v367, %v535
  %537 = vmatprep.mubr.bf16.mxu0 0
  %538 = vmatmul.mubr.bf16.gmra.mrb[0].mxu0 %v440
  %v539 = vpop.f32.mrb[0].mxu0
  %v540 = vadd.f32 %v363, %v539
  %v541 = vpop.f32.mrb[0].mxu0
  %v542 = vadd.f32 %v367, %v541
  %v543 = vpop.f32.mrb[0].mxu0
  %v544 = vadd.f32 %v363, %v543
  %v545 = vpop.f32.mrb[0].mxu0
  %v546 = vadd.f32 %v367, %v545
  %547 = vmatprep.mubr.bf16.mxu0 0
  %548 = vmatmul.mubr.bf16.gmra.mrb[0].mxu0 %v443
  %v549 = vpop.f32.mrb[0].mxu0
  %v550 = vadd.f32 %v363, %v549
  %v551 = vpop.f32.mrb[0].mxu0
  %v552 = vadd.f32 %v367, %v551
  %v553 = vpop.f32.mrb[0].mxu0
  %v554 = vadd.f32 %v363, %v553
  %v555 = vpop.f32.mrb[0].mxu0
  %v556 = vadd.f32 %v367, %v555
  %557 = vdwg.mxu0
  %558 = vmatprep.subr.bf16.mxu0 %v407
  %559 = vmatpush1.bf16.msra.mxu0 %v406
  %560 = vmatprep.subr.bf16.mxu0 %v411
  %561 = vmatpush1.bf16.msra.mxu0 %v410
  %562 = vmatprep.subr.bf16.mxu0 0
  %563 = vmatpush1.bf16.msra.mxu0 0
  %564 = vmatprep.subr.bf16.mxu0 0
  %565 = vmatpush1.bf16.msra.mxu0 0
  %566 = vmatprep.subr.bf16.mxu0 0
  %567 = vmatpush1.bf16.msra.mxu0 0
  %568 = vmatprep.subr.bf16.mxu0 0
  %569 = vmatpush1.bf16.msra.mxu0 0
  %570 = vmatprep.subr.bf16.mxu0 0
  %571 = vmatpush1.bf16.msra.mxu0 0
  %572 = vmatprep.subr.bf16.mxu0 0
  %573 = vmatpush1.bf16.msra.mxu0 0
  %574 = vmatprep.subr.bf16.mxu0 0
  %575 = vmatpush1.bf16.msra.mxu0 0
  %576 = vmatprep.subr.bf16.mxu0 0
  %577 = vmatpush1.bf16.msra.mxu0 0
  %578 = vmatprep.subr.bf16.mxu0 0
  %579 = vmatpush1.bf16.msra.mxu0 0
  %580 = vmatprep.subr.bf16.mxu0 0
  %581 = vmatpush1.bf16.msra.mxu0 0
  %582 = vmatprep.subr.bf16.mxu0 0
  %583 = vmatpush1.bf16.msra.mxu0 0
  %584 = vmatprep.subr.bf16.mxu0 0
  %585 = vmatpush1.bf16.msra.mxu0 0
  %586 = vmatprep.subr.bf16.mxu0 0
  %587 = vmatpush1.bf16.msra.mxu0 0
  %588 = vmatprep.subr.bf16.mxu0 0
  %589 = vmatpush1.bf16.msra.mxu0 0
  %590 = vmatprep.mubr.bf16.mxu0 0
  %591 = vmatmul.mubr.bf16.gmra.mrb[0].mxu0 %v422
  %v592 = vpop.f32.mrb[0].mxu0
  %v593 = vadd.f32 %v371, %v592
  %v594 = vpop.f32.mrb[0].mxu0
  %v595 = vadd.f32 %v375, %v594
  %v596 = vpop.f32.mrb[0].mxu0
  %v597 = vadd.f32 %v371, %v596
  %v598 = vpop.f32.mrb[0].mxu0
  %v599 = vadd.f32 %v375, %v598
  %600 = vmatprep.mubr.bf16.mxu0 0
  %601 = vmatmul.mubr.bf16.gmra.mrb[0].mxu0 %v425
  %v602 = vpop.f32.mrb[0].mxu0
  %v603 = vadd.f32 %v371, %v602
  %v604 = vpop.f32.mrb[0].mxu0
  %v605 = vadd.f32 %v375, %v604
  %v606 = vpop.f32.mrb[0].mxu0
  %v607 = vadd.f32 %v371, %v606
  %v608 = vpop.f32.mrb[0].mxu0
  %v609 = vadd.f32 %v375, %v608
  %610 = vmatprep.mubr.bf16.mxu0 0
  %611 = vmatmul.mubr.bf16.gmra.mrb[0].mxu0 %v428
  %v612 = vpop.f32.mrb[0].mxu0
  %v613 = vadd.f32 %v371, %v612
  %v614 = vpop.f32.mrb[0].mxu0
  %v615 = vadd.f32 %v375, %v614
  %v616 = vpop.f32.mrb[0].mxu0
  %v617 = vadd.f32 %v371, %v616
  %v618 = vpop.f32.mrb[0].mxu0
  %v619 = vadd.f32 %v375, %v618
  %620 = vmatprep.mubr.bf16.mxu0 0
  %621 = vmatmul.mubr.bf16.gmra.mrb[0].mxu0 %v431
  %v622 = vpop.f32.mrb[0].mxu0
  %v623 = vadd.f32 %v371, %v622
  %v624 = vpop.f32.mrb[0].mxu0
  %v625 = vadd.f32 %v375, %v624
  %v626 = vpop.f32.mrb[0].mxu0
  %v627 = vadd.f32 %v371, %v626
  %v628 = vpop.f32.mrb[0].mxu0
  %v629 = vadd.f32 %v375, %v628
  %630 = vmatprep.mubr.bf16.mxu0 0
  %631 = vmatmul.mubr.bf16.gmra.mrb[0].mxu0 %v434
  %v632 = vpop.f32.mrb[0].mxu0
  %v633 = vadd.f32 %v371, %v632
  %v634 = vpop.f32.mrb[0].mxu0
  %v635 = vadd.f32 %v375, %v634
  %v636 = vpop.f32.mrb[0].mxu0
  %v637 = vadd.f32 %v371, %v636
  %v638 = vpop.f32.mrb[0].mxu0
  %v639 = vadd.f32 %v375, %v638
  %640 = vmatprep.mubr.bf16.mxu0 0
  %641 = vmatmul.mubr.bf16.gmra.mrb[0].mxu0 %v437
  %v642 = vpop.f32.mrb[0].mxu0
  %v643 = vadd.f32 %v371, %v642
  %v644 = vpop.f32.mrb[0].mxu0
  %v645 = vadd.f32 %v375, %v644
  %v646 = vpop.f32.mrb[0].mxu0
  %v647 = vadd.f32 %v371, %v646
  %v648 = vpop.f32.mrb[0].mxu0
  %v649 = vadd.f32 %v375, %v648
  %650 = vmatprep.mubr.bf16.mxu0 0
  %651 = vmatmul.mubr.bf16.gmra.mrb[0].mxu0 %v440
  %v652 = vpop.f32.mrb[0].mxu0
  %v653 = vadd.f32 %v371, %v652
  %v654 = vpop.f32.mrb[0].mxu0
  %v655 = vadd.f32 %v375, %v654
  %v656 = vpop.f32.mrb[0].mxu0
  %v657 = vadd.f32 %v371, %v656
  %v658 = vpop.f32.mrb[0].mxu0
  %v659 = vadd.f32 %v375, %v658
  %660 = vmatprep.mubr.bf16.mxu0 0
  %661 = vmatmul.mubr.bf16.gmra.mrb[0].mxu0 %v443
  %v662 = vpop.f32.mrb[0].mxu0
  %v663 = vadd.f32 %v371, %v662
  %v664 = vpop.f32.mrb[0].mxu0
  %v665 = vadd.f32 %v375, %v664
  %v666 = vpop.f32.mrb[0].mxu0
  %v667 = vadd.f32 %v371, %v666
  %v668 = vpop.f32.mrb[0].mxu0
  %v669 = vadd.f32 %v375, %v668
  %670 = vdwg.mxu0
  %v671 = vpack.c.bf16 %v484, %v480
  %v672 = vpack.c.bf16 %v486, %v482
  %v673 = vpack.c.bf16 %v597, %v593
  %v674 = vpack.c.bf16 %v599, %v595
  %v675 = vpack.c.bf16 %v494, %v490
  %v676 = vpack.c.bf16 %v496, %v492
  %v677 = vpack.c.bf16 %v607, %v603
  %v678 = vpack.c.bf16 %v609, %v605
  %v679 = vpack.c.bf16 %v504, %v500
  %v680 = vpack.c.bf16 %v506, %v502
  %v681 = vpack.c.bf16 %v617, %v613
  %v682 = vpack.c.bf16 %v619, %v615
  %v683 = vpack.c.bf16 %v514, %v510
  %v684 = vpack.c.bf16 %v516, %v512
  %v685 = vpack.c.bf16 %v627, %v623
  %v686 = vpack.c.bf16 %v629, %v625
  %v687 = vpack.c.bf16 %v524, %v520
  %v688 = vpack.c.bf16 %v526, %v522
  %v689 = vpack.c.bf16 %v637, %v633
  %v690 = vpack.c.bf16 %v639, %v635
  %v691 = vpack.c.bf16 %v534, %v530
  %v692 = vpack.c.bf16 %v536, %v532
  %v693 = vpack.c.bf16 %v647, %v643
  %v694 = vpack.c.bf16 %v649, %v645
  %v695 = vpack.c.bf16 %v544, %v540
  %v696 = vpack.c.bf16 %v546, %v542
  %v697 = vpack.c.bf16 %v657, %v653
  %v698 = vpack.c.bf16 %v659, %v655
  %v699 = vpack.c.bf16 %v554, %v550
  %v700 = vpack.c.bf16 %v556, %v552
  %v701 = vpack.c.bf16 %v667, %v663
  %v702 = vpack.c.bf16 %v669, %v665
  %v735 = vunpack.c.l.b16 %v671
  %v736 = vunpack.c.l.b16 %v672
  %v737 = vunpack.c.l.b16 %v673
  %v738 = vunpack.c.l.b16 %v674
  %v739 = vunpack.c.h.b16 %v671
  %v740 = vunpack.c.h.b16 %v672
  %v741 = vunpack.c.h.b16 %v673
  %v742 = vunpack.c.h.b16 %v674
  %v743 = vunpack.c.l.b16 %v675
  %v744 = vunpack.c.l.b16 %v676
  %v745 = vunpack.c.l.b16 %v677
  %v746 = vunpack.c.l.b16 %v678
  %v747 = vunpack.c.h.b16 %v675
  %v748 = vunpack.c.h.b16 %v676
  %v749 = vunpack.c.h.b16 %v677
  %v750 = vunpack.c.h.b16 %v678
  %v751 = vunpack.c.l.b16 %v679
  %v752 = vunpack.c.l.b16 %v680
  %v753 = vunpack.c.l.b16 %v681
  %v754 = vunpack.c.l.b16 %v682
  %v755 = vunpack.c.h.b16 %v679
  %v756 = vunpack.c.h.b16 %v680
  %v757 = vunpack.c.h.b16 %v681
  %v758 = vunpack.c.h.b16 %v682
  %v759 = vunpack.c.l.b16 %v683
  %v760 = vunpack.c.l.b16 %v684
  %v761 = vunpack.c.l.b16 %v685
  %v762 = vunpack.c.l.b16 %v686
  %v763 = vunpack.c.h.b16 %v683
  %v764 = vunpack.c.h.b16 %v684
  %v765 = vunpack.c.h.b16 %v685
  %v766 = vunpack.c.h.b16 %v686
  %v767 = vunpack.c.l.b16 %v687
  %v768 = vunpack.c.l.b16 %v688
  %v769 = vunpack.c.l.b16 %v689
  %v770 = vunpack.c.l.b16 %v690
  %v771 = vunpack.c.h.b16 %v687
  %v772 = vunpack.c.h.b16 %v688
  %v773 = vunpack.c.h.b16 %v689
  %v774 = vunpack.c.h.b16 %v690
  %v775 = vunpack.c.l.b16 %v691
  %v776 = vunpack.c.l.b16 %v692
  %v777 = vunpack.c.l.b16 %v693
  %v778 = vunpack.c.l.b16 %v694
  %v779 = vunpack.c.h.b16 %v691
  %v780 = vunpack.c.h.b16 %v692
  %v781 = vunpack.c.h.b16 %v693
  %v782 = vunpack.c.h.b16 %v694
  %v783 = vunpack.c.l.b16 %v695
  %v784 = vunpack.c.l.b16 %v696
  %v785 = vunpack.c.l.b16 %v697
  %v786 = vunpack.c.l.b16 %v698
  %v787 = vunpack.c.h.b16 %v695
  %v788 = vunpack.c.h.b16 %v696
  %v789 = vunpack.c.h.b16 %v697
  %v790 = vunpack.c.h.b16 %v698
  %v791 = vunpack.c.l.b16 %v699
  %v792 = vunpack.c.l.b16 %v700
  %v793 = vunpack.c.l.b16 %v701
  %v794 = vunpack.c.l.b16 %v702
  %v795 = vunpack.c.h.b16 %v699
  %v796 = vunpack.c.h.b16 %v700
  %v797 = vunpack.c.h.b16 %v701
  %v798 = vunpack.c.h.b16 %v702
  %v799 = vpack.c.b16 %v736, %v735
  %v800 = vpack.c.b16 %v738, %v737
  %v801 = vpack.c.b16 %v740, %v739
  %v802 = vpack.c.b16 %v742, %v741
  %v803 = vpack.c.b16 %v744, %v743
  %v804 = vpack.c.b16 %v746, %v745
  %v805 = vpack.c.b16 %v748, %v747
  %v806 = vpack.c.b16 %v750, %v749
  %v807 = vpack.c.b16 %v752, %v751
  %v808 = vpack.c.b16 %v754, %v753
  %v809 = vpack.c.b16 %v756, %v755
  %v810 = vpack.c.b16 %v758, %v757
  %v811 = vpack.c.b16 %v760, %v759
  %v812 = vpack.c.b16 %v762, %v761
  %v813 = vpack.c.b16 %v764, %v763
  %v814 = vpack.c.b16 %v766, %v765
  %v815 = vpack.c.b16 %v768, %v767
  %v816 = vpack.c.b16 %v770, %v769
  %v817 = vpack.c.b16 %v772, %v771
  %v818 = vpack.c.b16 %v774, %v773
  %v819 = vpack.c.b16 %v776, %v775
  %v820 = vpack.c.b16 %v778, %v777
  %v821 = vpack.c.b16 %v780, %v779
  %v822 = vpack.c.b16 %v782, %v781
  %v823 = vpack.c.b16 %v784, %v783
  %v824 = vpack.c.b16 %v786, %v785
  %v825 = vpack.c.b16 %v788, %v787
  %v826 = vpack.c.b16 %v790, %v789
  %v827 = vpack.c.b16 %v792, %v791
  %v828 = vpack.c.b16 %v794, %v793
  %v829 = vpack.c.b16 %v796, %v795
  %v830 = vpack.c.b16 %v798, %v797
  %863 = vst [vmem:[%s5] sm:$0xff] %v799
  %vm864 = vcmask 1043456
  %vm865 = vcmask 392196
  %vm866 = vmor %vm865, %vm864
  %867 = vst.msk [vmem:[%s5 + $0x8] sm:$0xff] %vm866, %v800
  %868 = vst [vmem:[%s5 + $0x10] sm:$0xff] %v801
  %869 = vst.msk [vmem:[%s5 + $0x18] sm:$0xff] %vm866, %v802
  %870 = vst [vmem:[%s5 + $0x20] sm:$0xff] %v803
  %871 = vst.msk [vmem:[%s5 + $0x28] sm:$0xff] %vm866, %v804
  %872 = vst [vmem:[%s5 + $0x30] sm:$0xff] %v805
  %873 = vst.msk [vmem:[%s5 + $0x38] sm:$0xff] %vm866, %v806
  %874 = vst [vmem:[%s5 + $0x40] sm:$0xff] %v807
  %875 = vst.msk [vmem:[%s5 + $0x48] sm:$0xff] %vm866, %v808
  %876 = vst [vmem:[%s5 + $0x50] sm:$0xff] %v809
  %877 = vst.msk [vmem:[%s5 + $0x58] sm:$0xff] %vm866, %v810
  %878 = vst [vmem:[%s5 + $0x60] sm:$0xff] %v811
  %879 = vst.msk [vmem:[%s5 + $0x68] sm:$0xff] %vm866, %v812
  %880 = vst [vmem:[%s5 + $0x70] sm:$0xff] %v813
  %881 = vst.msk [vmem:[%s5 + $0x78] sm:$0xff] %vm866, %v814
  %882 = vst [vmem:[%s5 + $0x80] sm:$0xff] %v815
  %883 = vst.msk [vmem:[%s5 + $0x88] sm:$0xff] %vm866, %v816
  %884 = vst [vmem:[%s5 + $0x90] sm:$0xff] %v817
  %885 = vst.msk [vmem:[%s5 + $0x98] sm:$0xff] %vm866, %v818
  %886 = vst [vmem:[%s5 + $0xa0] sm:$0xff] %v819
  %887 = vst.msk [vmem:[%s5 + $0xa8] sm:$0xff] %vm866, %v820
  %888 = vst [vmem:[%s5 + $0xb0] sm:$0xff] %v821
  %889 = vst.msk [vmem:[%s5 + $0xb8] sm:$0xff] %vm866, %v822
  %890 = vst [vmem:[%s5 + $0xc0] sm:$0xff] %v823
  %891 = vst.msk [vmem:[%s5 + $0xc8] sm:$0xff] %vm866, %v824
  %892 = vst [vmem:[%s5 + $0xd0] sm:$0xff] %v825
  %893 = vst.msk [vmem:[%s5 + $0xd8] sm:$0xff] %vm866, %v826
  %894 = vst [vmem:[%s5 + $0xe0] sm:$0xff] %v827
  %895 = vst.msk [vmem:[%s5 + $0xe8] sm:$0xff] %vm866, %v828
  %896 = vst [vmem:[%s5 + $0xf0] sm:$0xff] %v829
  %897 = vst.msk [vmem:[%s5 + $0xf8] sm:$0xff] %vm866, %v830
  %v898 = vpack.c.bf16 %v171, %v168
  %v899 = vpack.c.bf16 %v179, %v176
  %v900 = vpack.c.bf16 %v187, %v184
  %v901 = vpack.c.bf16 %v195, %v192
  %v902 = vpack.c.bf16 %v203, %v200
  %v903 = vpack.c.bf16 %v211, %v208
  %v904 = vpack.c.bf16 %v219, %v216
  %v905 = vpack.c.bf16 %v227, %v224
  %v914 = vunpack.c.l.b16 %v898
  %v915 = vunpack.c.h.b16 %v898
  %v916 = vunpack.c.l.b16 %v899
  %v917 = vunpack.c.h.b16 %v899
  %v918 = vunpack.c.l.b16 %v900
  %v919 = vunpack.c.h.b16 %v900
  %v920 = vunpack.c.l.b16 %v901
  %v921 = vunpack.c.h.b16 %v901
  %v922 = vunpack.c.l.b16 %v902
  %v923 = vunpack.c.h.b16 %v902
  %v924 = vunpack.c.l.b16 %v903
  %v925 = vunpack.c.h.b16 %v903
  %v926 = vunpack.c.l.b16 %v904
  %v927 = vunpack.c.h.b16 %v904
  %v928 = vunpack.c.l.b16 %v905
  %v929 = vunpack.c.h.b16 %v905
  %v930 = vpack.c.b16 %v914, %v914
  %v931 = vpack.c.b16 %v915, %v915
  %v932 = vpack.c.b16 %v916, %v916
  %v933 = vpack.c.b16 %v917, %v917
  %v934 = vpack.c.b16 %v918, %v918
  %v935 = vpack.c.b16 %v919, %v919
  %v936 = vpack.c.b16 %v920, %v920
  %v937 = vpack.c.b16 %v921, %v921
  %v938 = vpack.c.b16 %v922, %v922
  %v939 = vpack.c.b16 %v923, %v923
  %v940 = vpack.c.b16 %v924, %v924
  %v941 = vpack.c.b16 %v925, %v925
  %v942 = vpack.c.b16 %v926, %v926
  %v943 = vpack.c.b16 %v927, %v927
  %v944 = vpack.c.b16 %v928, %v928
  %v945 = vpack.c.b16 %v929, %v929
  %946 = vrot.lane.b32.xlu0 %v930, 16
  %v947 = vpop.permute.xlu0 %946
  %948 = vrot.lane.b32.xlu0 %v931, 16
  %v949 = vpop.permute.xlu0 %948
  %950 = vrot.lane.b32.xlu0 %v932, 16
  %v951 = vpop.permute.xlu0 %950
  %952 = vrot.lane.b32.xlu0 %v933, 16
  %v953 = vpop.permute.xlu0 %952
  %954 = vrot.lane.b32.xlu0 %v934, 16
  %v955 = vpop.permute.xlu0 %954
  %956 = vrot.lane.b32.xlu0 %v935, 16
  %v957 = vpop.permute.xlu0 %956
  %958 = vrot.lane.b32.xlu0 %v936, 16
  %v959 = vpop.permute.xlu0 %958
  %960 = vrot.lane.b32.xlu0 %v937, 16
  %v961 = vpop.permute.xlu0 %960
  %962 = vrot.lane.b32.xlu0 %v938, 16
  %v963 = vpop.permute.xlu0 %962
  %964 = vrot.lane.b32.xlu0 %v939, 16
  %v965 = vpop.permute.xlu0 %964
  %966 = vrot.lane.b32.xlu0 %v940, 16
  %v967 = vpop.permute.xlu0 %966
  %968 = vrot.lane.b32.xlu0 %v941, 16
  %v969 = vpop.permute.xlu0 %968
  %970 = vrot.lane.b32.xlu0 %v942, 16
  %v971 = vpop.permute.xlu0 %970
  %972 = vrot.lane.b32.xlu0 %v943, 16
  %v973 = vpop.permute.xlu0 %972
  %974 = vrot.lane.b32.xlu0 %v944, 16
  %v975 = vpop.permute.xlu0 %974
  %976 = vrot.lane.b32.xlu0 %v945, 16
  %v977 = vpop.permute.xlu0 %976
  %vm994 = vcmask 1043840
  %995 = vst.msk [vmem:[%s5 + $0xc] sm:$0xf] %vm994, %v947
  %996 = vst.msk [vmem:[%s5 + $0x1c] sm:$0xf] %vm994, %v949
  %997 = vst.msk [vmem:[%s5 + $0x2c] sm:$0xf] %vm994, %v951
  %998 = vst.msk [vmem:[%s5 + $0x3c] sm:$0xf] %vm994, %v953
  %999 = vst.msk [vmem:[%s5 + $0x4c] sm:$0xf] %vm994, %v955
  %1000 = vst.msk [vmem:[%s5 + $0x5c] sm:$0xf] %vm994, %v957
  %1001 = vst.msk [vmem:[%s5 + $0x6c] sm:$0xf] %vm994, %v959
  %1002 = vst.msk [vmem:[%s5 + $0x7c] sm:$0xf] %vm994, %v961
  %1003 = vst.msk [vmem:[%s5 + $0x8c] sm:$0xf] %vm994, %v963
  %1004 = vst.msk [vmem:[%s5 + $0x9c] sm:$0xf] %vm994, %v965
  %1005 = vst.msk [vmem:[%s5 + $0xac] sm:$0xf] %vm994, %v967
  %1006 = vst.msk [vmem:[%s5 + $0xbc] sm:$0xf] %vm994, %v969
  %1007 = vst.msk [vmem:[%s5 + $0xcc] sm:$0xf] %vm994, %v971
  %1008 = vst.msk [vmem:[%s5 + $0xdc] sm:$0xf] %vm994, %v973
  %1009 = vst.msk [vmem:[%s5 + $0xec] sm:$0xf] %vm994, %v975
  %1010 = vst.msk [vmem:[%s5 + $0xfc] sm:$0xf] %vm994, %v977
  // Predicated region
  $region22: #{model_forward.4} parent=0 // pred_check
    _
  $region23: #{model_forward.4} parent=0 // pred_check_branch
    %1012 = sbr.rel (0) target = $region25
  $region24: #{model_forward.4} parent=0 // pred_region
    _
  $region25: #{model_forward.4} parent=0 // pred_fallthru
    _
  // Predicated region
  $region26: #{model_forward.4} parent=0 // pred_check
    _
  $region27: #{model_forward.4} parent=0 // pred_check_branch
    %1014 = sbr.rel (0) target = $region29
  $region28: #{model_forward.4} parent=0 // pred_region
    _
  $region29: #{model_forward.4} parent=0 // pred_fallthru
    _

// kernel: model_forward.5
$region0: #{model_forward.5}
  #allocation0 [shape = 'u32[]', space=smem, size = 0x4, offset = 0x4, fixed_abs, tag = 'smem constant byte address 0x4 - core index']
  #allocation1 [shape = 'u32[144,128]{1,0:T(1,128)}', space=vmem, size = 0x12000, scoped, tag = 'internal scratch']
  %s0 = inlined_call_operand.vmem [shape: bf16[10,8,128], index: 0, kind: input, shape index: {}]
  %s1 = inlined_call_operand.vmem [shape: bf16[10,8,128], index: 1, kind: input, shape index: {}]
  %s2 = inlined_call_operand.vmem [shape: f32[8,128], index: 2, kind: input, shape index: {}]
  %s3 = inlined_call_operand.vmem [shape: bf16[10,8,128], index: 3, kind: input, shape index: {}]
  %s4 = inlined_call_operand.vmem [shape: f32[10,128], index: 4, kind: output, shape index: {}]
  %s5 = sld [smem:[#allocation0]]
  $region26: #{model_forward.5} parent=0
    _
  %s7 = ssub.s32 1, %s5
  %s8 = scalar_select 0, %s7, %s5
  // Predicated region
  $region2: #{model_forward.5} parent=0 // pred_check
    _
  $region3: #{model_forward.5} parent=0 // pred_check_branch
    %10 = sbr.rel (0) target = $region5
  $region4: #{model_forward.5} parent=0 // pred_region
    _
  $region5: #{model_forward.5} parent=0 // pred_fallthru
    _
  // Predicated region
  $region6: #{model_forward.5} parent=0 // pred_check
    _
  $region7: #{model_forward.5} parent=0 // pred_check_branch
    %12 = sbr.rel (0) target = $region9
  $region8: #{model_forward.5} parent=0 // pred_region
    _
  $region9: #{model_forward.5} parent=0 // pred_fallthru
    _
  // Predicated region
  $region10: #{model_forward.5} parent=0 // pred_check
    _
  $region11: #{model_forward.5} parent=0 // pred_check_branch
    %14 = sbr.rel (0) target = $region13
  $region12: #{model_forward.5} parent=0 // pred_region
    _
  $region13: #{model_forward.5} parent=0 // pred_fallthru
    _
  // Predicated region
  $region14: #{model_forward.5} parent=0 // pred_check
    _
  $region15: #{model_forward.5} parent=0 // pred_check_branch
    %16 = sbr.rel (0) target = $region17
  $region16: #{model_forward.5} parent=0 // pred_region
    _
  $region17: #{model_forward.5} parent=0 // pred_fallthru
    _
  %v17 = vld [vmem:[%s0] sm:$0xf]
  %v18 = vld [vmem:[%s0 + $0x4] sm:$0xf]
  %v19 = vld [vmem:[%s0 + $0x8] sm:$0xf]
  %v20 = vld [vmem:[%s0 + $0xc] sm:$0xf]
  %v21 = vld [vmem:[%s0 + $0x10] sm:$0xf]
  %v22 = vld [vmem:[%s0 + $0x14] sm:$0xf]
  %v23 = vld [vmem:[%s0 + $0x18] sm:$0xf]
  %v24 = vld [vmem:[%s0 + $0x1c] sm:$0xf]
  %v25 = vld [vmem:[%s0 + $0x20] sm:$0xf]
  %v26 = vld [vmem:[%s0 + $0x24] sm:$0xf]
  %v27 = vunpack.c.l.bf16 %v17
  %v28 = vunpack.c.l.bf16 %v18
  %v29 = vunpack.c.l.bf16 %v19
  %v30 = vunpack.c.l.bf16 %v20
  %v31 = vunpack.c.l.bf16 %v21
  %v32 = vunpack.c.l.bf16 %v22
  %v33 = vunpack.c.l.bf16 %v23
  %v34 = vunpack.c.l.bf16 %v24
  %v35 = vunpack.c.l.bf16 %v25
  %v36 = vunpack.c.l.bf16 %v26
  %v37 = vld [vmem:[%s1] sm:$0xf]
  %v38 = vld [vmem:[%s1 + $0x4] sm:$0xf]
  %v39 = vld [vmem:[%s1 + $0x8] sm:$0xf]
  %v40 = vld [vmem:[%s1 + $0xc] sm:$0xf]
  %v41 = vld [vmem:[%s1 + $0x10] sm:$0xf]
  %v42 = vld [vmem:[%s1 + $0x14] sm:$0xf]
  %v43 = vld [vmem:[%s1 + $0x18] sm:$0xf]
  %v44 = vld [vmem:[%s1 + $0x1c] sm:$0xf]
  %v45 = vld [vmem:[%s1 + $0x20] sm:$0xf]
  %v46 = vld [vmem:[%s1 + $0x24] sm:$0xf]
  %v47 = vunpack.c.l.bf16 %v37
  %v48 = vunpack.c.l.bf16 %v38
  %v49 = vunpack.c.l.bf16 %v39
  %v50 = vunpack.c.l.bf16 %v40
  %v51 = vunpack.c.l.bf16 %v41
  %v52 = vunpack.c.l.bf16 %v42
  %v53 = vunpack.c.l.bf16 %v43
  %v54 = vunpack.c.l.bf16 %v44
  %v55 = vunpack.c.l.bf16 %v45
  %v56 = vunpack.c.l.bf16 %v46
  %v57 = vmul.f32 %v27, %v47
  %v58 = vmul.f32 %v28, %v48
  %v59 = vmul.f32 %v29, %v49
  %v60 = vmul.f32 %v30, %v50
  %v61 = vmul.f32 %v31, %v51
  %v62 = vmul.f32 %v32, %v52
  %v63 = vmul.f32 %v33, %v53
  %v64 = vmul.f32 %v34, %v54
  %v65 = vmul.f32 %v35, %v55
  %v66 = vmul.f32 %v36, %v56
  %v67 = vadd.f32 %v57, %v58
  %v68 = vadd.f32 %v67, %v59
  %v69 = vadd.f32 %v68, %v60
  %v70 = vadd.f32 %v69, %v61
  %v71 = vadd.f32 %v70, %v62
  %v72 = vadd.f32 %v71, %v63
  %v73 = vadd.f32 %v72, %v64
  %v74 = vadd.f32 %v73, %v65
  %v75 = vadd.f32 %v74, %v66
  %v76 = vld [vmem:[%s2] sm:$0xff]
  %v77 = vadd.f32 %v75, %v76
  %v78 = vrot.slane %v77, 4
  %v79 = vmax.f32 %v77, %v78
  %v80 = vrot.slane %v79, 2
  %v81 = vmax.f32 %v79, %v80
  %v82 = vrot.slane %v81, 1
  %v83 = vmax.f32 %v81, %v82
  %v84 = vsub.f32 %v77, %v83
  %v85 = vmul.f32 %v84, 1.442695
  %v86 = vpow.pop %v85
  %v87 = vrot.slane %v86, 4
  %v88 = vadd.f32 %v86, %v87
  %v89 = vrot.slane %v88, 2
  %v90 = vadd.f32 %v88, %v89
  %v91 = vrot.slane %v90, 1
  %v92 = vadd.f32 %v90, %v91
  %v93 = vrcp.pop %v92
  %v94 = vmul.f32 %v86, %v93
  %v95 = vld [vmem:[%s3] sm:$0xf]
  %v96 = vld [vmem:[%s3 + $0x4] sm:$0xf]
  %v97 = vld [vmem:[%s3 + $0x8] sm:$0xf]
  %v98 = vld [vmem:[%s3 + $0xc] sm:$0xf]
  %v99 = vld [vmem:[%s3 + $0x10] sm:$0xf]
  %v100 = vld [vmem:[%s3 + $0x14] sm:$0xf]
  %v101 = vld [vmem:[%s3 + $0x18] sm:$0xf]
  %v102 = vld [vmem:[%s3 + $0x1c] sm:$0xf]
  %v103 = vld [vmem:[%s3 + $0x20] sm:$0xf]
  %v104 = vld [vmem:[%s3 + $0x24] sm:$0xf]
  %v105 = vunpack.c.l.bf16 %v95
  %v106 = vunpack.c.l.bf16 %v96
  %v107 = vunpack.c.l.bf16 %v97
  %v108 = vunpack.c.l.bf16 %v98
  %v109 = vunpack.c.l.bf16 %v99
  %v110 = vunpack.c.l.bf16 %v100
  %v111 = vunpack.c.l.bf16 %v101
  %v112 = vunpack.c.l.bf16 %v102
  %v113 = vunpack.c.l.bf16 %v103
  %v114 = vunpack.c.l.bf16 %v104
  %v115 = vmul.f32 %v94, %v105
  %v116 = vmul.f32 %v94, %v106
  %v117 = vmul.f32 %v94, %v107
  %v118 = vmul.f32 %v94, %v108
  %v119 = vmul.f32 %v94, %v109
  %v120 = vmul.f32 %v94, %v110
  %v121 = vmul.f32 %v94, %v111
  %v122 = vmul.f32 %v94, %v112
  %v123 = vmul.f32 %v94, %v113
  %v124 = vmul.f32 %v94, %v114
  %v125 = vrot.slane %v115, 4
  %v126 = vadd.f32 %v115, %v125
  %v127 = vrot.slane %v126, 2
  %v128 = vadd.f32 %v126, %v127
  %v129 = vrot.slane %v128, 1
  %v130 = vadd.f32 %v128, %v129
  %v131 = vrot.slane %v116, 4
  %v132 = vadd.f32 %v116, %v131
  %v133 = vrot.slane %v132, 2
  %v134 = vadd.f32 %v132, %v133
  %v135 = vrot.slane %v134, 1
  %v136 = vadd.f32 %v134, %v135
  %v137 = vrot.slane %v117, 4
  %v138 = vadd.f32 %v117, %v137
  %v139 = vrot.slane %v138, 2
  %v140 = vadd.f32 %v138, %v139
  %v141 = vrot.slane %v140, 1
  %v142 = vadd.f32 %v140, %v141
  %v143 = vrot.slane %v118, 4
  %v144 = vadd.f32 %v118, %v143
  %v145 = vrot.slane %v144, 2
  %v146 = vadd.f32 %v144, %v145
  %v147 = vrot.slane %v146, 1
  %v148 = vadd.f32 %v146, %v147
  %v149 = vrot.slane %v119, 4
  %v150 = vadd.f32 %v119, %v149
  %v151 = vrot.slane %v150, 2
  %v152 = vadd.f32 %v150, %v151
  %v153 = vrot.slane %v152, 1
  %v154 = vadd.f32 %v152, %v153
  %v155 = vrot.slane %v120, 4
  %v156 = vadd.f32 %v120, %v155
  %v157 = vrot.slane %v156, 2
  %v158 = vadd.f32 %v156, %v157
  %v159 = vrot.slane %v158, 1
  %v160 = vadd.f32 %v158, %v159
  %v161 = vrot.slane %v121, 4
  %v162 = vadd.f32 %v121, %v161
  %v163 = vrot.slane %v162, 2
  %v164 = vadd.f32 %v162, %v163
  %v165 = vrot.slane %v164, 1
  %v166 = vadd.f32 %v164, %v165
  %v167 = vrot.slane %v122, 4
  %v168 = vadd.f32 %v122, %v167
  %v169 = vrot.slane %v168, 2
  %v170 = vadd.f32 %v168, %v169
  %v171 = vrot.slane %v170, 1
  %v172 = vadd.f32 %v170, %v171
  %v173 = vrot.slane %v123, 4
  %v174 = vadd.f32 %v123, %v173
  %v175 = vrot.slane %v174, 2
  %v176 = vadd.f32 %v174, %v175
  %v177 = vrot.slane %v176, 1
  %v178 = vadd.f32 %v176, %v177
  %v179 = vrot.slane %v124, 4
  %v180 = vadd.f32 %v124, %v179
  %v181 = vrot.slane %v180, 2
  %v182 = vadd.f32 %v180, %v181
  %v183 = vrot.slane %v182, 1
  %v184 = vadd.f32 %v182, %v183
  %vm195 = vcmask 1041409
  %v196 = vsel %vm195, %v136, %v130
  %vm197 = vcmask 1042434
  %v198 = vsel %vm197, %v142, %v196
  %vm199 = vcmask 1043459
  %v200 = vsel %vm199, %v148, %v198
  %vm201 = vcmask 1044484
  %v202 = vsel %vm201, %v154, %v200
  %vm203 = vcmask 1045509
  %v204 = vsel %vm203, %v160, %v202
  %vm205 = vcmask 1046534
  %v206 = vsel %vm205, %v166, %v204
  %vm207 = vcmask 1047559
  %v208 = vsel %vm207, %v172, %v206
  %v209 = vsel %vm195, %v184, %v178
  %212 = vst [vmem:[%s4] sm:$0xff] %v208
  %213 = vst [vmem:[%s4 + $0x8] sm:$0x3] %v209
  // Predicated region
  $region18: #{model_forward.5} parent=0 // pred_check
    _
  $region19: #{model_forward.5} parent=0 // pred_check_branch
    %215 = sbr.rel (0) target = $region21
  $region20: #{model_forward.5} parent=0 // pred_region
    _
  $region21: #{model_forward.5} parent=0 // pred_fallthru
    _
  // Predicated region
  $region22: #{model_forward.5} parent=0 // pred_check
    _
  $region23: #{model_forward.5} parent=0 // pred_check_branch
    %217 = sbr.rel (0) target = $region25
  $region24: #{model_forward.5} parent=0 // pred_region
    _
  $region25: #{model_forward.5} parent=0 // pred_fallthru
    _

</llo_original>
